<compile_context>
chip_gen: v7x
topology: tpu7x:2x2x1
jax: 0.10.0
libtpu: 0.0.40
codegen_flags: <defaults>
</compile_context>

<pallas_src>
import functools

import jax
import jax.numpy as jnp
from jax.experimental import pallas as pl
from jax.experimental.pallas import tpu as pltpu


# ----------------------------------------------------------------------------
# Fused Pallas kernel: full GAT forward (nheads attention heads + out_att)
# ----------------------------------------------------------------------------
def _gat_fused_kernel(x_ref, w_all_ref, a12_ref, w_out_ref, a_out12_ref,
                      adj_ref, o_ref, *, alpha, nheads, nhid, nclass):
    x = x_ref[...].astype(jnp.float32)                 # (N, nfeat)
    adj = adj_ref[...]                                 # (N, N)
    neg_big = jnp.float32(-9000000000000000.0)         # exact PyTorch constant

    # ---- all heads' h in one wide MXU matmul --------------------------------
    h_all = jnp.dot(x, w_all_ref[...],
                    preferred_element_type=jnp.float32)        # (N, nhid*nheads)

    # ---- all heads' attention scores in one MXU matmul ----------------------
    # a12 is block diagonal: column hd holds a1 of head hd, column nheads+hd
    # holds a2 of head hd (each confined to that head's nhid rows).
    f12 = jnp.dot(h_all, a12_ref[...],
                  preferred_element_type=jnp.float32)          # (N, 2*nheads)
    f12_t = jnp.transpose(f12)                                 # (2*nheads, N)

    def attend(f1_col, f2_row, h):
        # e[i, j] = leakyrelu(f1[i] + f2[j])
        e = f1_col + f2_row                                    # (N, N)
        e = jnp.where(e > 0, e, alpha * e)                     # LeakyReLU
        att = jnp.where(adj > 0, e, neg_big)                   # mask non-edges
        att = jnp.exp(att - jnp.max(att, axis=1, keepdims=True))
        inv = pl.reciprocal(jnp.sum(att, axis=1, keepdims=True), approx=True)
        att = att * inv                                        # softmax(dim=1)
        # F.dropout on attention: eval mode -> identity
        return jnp.dot(att, h, preferred_element_type=jnp.float32)

    # ---- per-head attention + ELU, folded directly into the out-layer matmul:
    #      concat(heads) @ W_out == sum_h head_h @ W_out[h*nhid:(h+1)*nhid, :]
    w_out = w_out_ref[...]                                     # (nhid*nheads, nclass)
    N = x.shape[0]
    h_out = jnp.zeros((N, nclass), jnp.float32)
    for hd in range(nheads):
        h_head = h_all[:, hd * nhid:(hd + 1) * nhid]           # (N, nhid)
        f1 = f12[:, hd:hd + 1]                                 # (N, 1)
        f2 = f12_t[nheads + hd:nheads + hd + 1, :]             # (1, N)
        hp = attend(f1, f2, h_head)                            # (N, nhid)
        hp = jnp.where(hp > 0, hp, jnp.exp(hp) - 1.0)          # ELU (concat=True)
        h_out = h_out + jnp.dot(hp, w_out[hd * nhid:(hd + 1) * nhid, :],
                                preferred_element_type=jnp.float32)

    # ---- output attention layer (concat=False) ------------------------------
    f12o = jnp.dot(h_out, a_out12_ref[...],
                   preferred_element_type=jnp.float32)         # (N, 2)
    f12o_t = jnp.transpose(f12o)                               # (2, N)
    hp_out = attend(f12o[:, 0:1], f12o_t[1:2, :], h_out)       # (N, nclass)

    # ELU then softmax(dim=1) (GAT.forward epilogue)
    out = jnp.where(hp_out > 0, hp_out, jnp.exp(hp_out) - 1.0)
    out = jnp.exp(out - jnp.max(out, axis=1, keepdims=True))
    out = out * pl.reciprocal(jnp.sum(out, axis=1, keepdims=True), approx=True)

    o_ref[...] = out.astype(o_ref.dtype)


# ----------------------------------------------------------------------------
# Wrapper: pack parameters and launch the single fused kernel
# ----------------------------------------------------------------------------
def gat_forward(x, adj, params, *, alpha):
    # x: (1, N, nfeat) -> squeeze(0); F.dropout (eval mode) = identity
    x2d = x[0]
    N, _ = x2d.shape
    nheads = len(params["heads"])
    nhid = params["heads"][0][0].shape[1]
    nclass = params["W_out"].shape[1]

    # Stack per-head W -> one wide matmul operand.
    W_all = jnp.concatenate([W for (W, _) in params["heads"]], axis=1)

    # Block-diagonal packing of per-head attention vectors:
    #   A12[hd*nhid:(hd+1)*nhid, hd]          = a1 of head hd
    #   A12[hd*nhid:(hd+1)*nhid, nheads + hd] = a2 of head hd
    A12 = jnp.zeros((nhid * nheads, 2 * nheads), jnp.float32)
    for hd, (_, a) in enumerate(params["heads"]):
        A12 = A12.at[hd * nhid:(hd + 1) * nhid, hd].set(a[:nhid, 0])
        A12 = A12.at[hd * nhid:(hd + 1) * nhid, nheads + hd].set(a[nhid:, 0])

    # Output layer attention vector split into two columns.
    a_out = params["a_out"]
    a_out12 = jnp.concatenate([a_out[:nclass, :], a_out[nclass:, :]], axis=1)

    kernel = functools.partial(_gat_fused_kernel, alpha=alpha,
                               nheads=nheads, nhid=nhid, nclass=nclass)
    vmem = pl.BlockSpec(memory_space=pltpu.MemorySpace.VMEM)
    return pl.pallas_call(
        kernel,
        out_shape=jax.ShapeDtypeStruct((N, nclass), jnp.float32),
        in_specs=[vmem] * 6,
        out_specs=vmem,
    )(x2d, W_all, A12, params["W_out"], a_out12, adj)


# ----------------------------------------------------------------------------
# Deterministic parameter init (xavier_uniform_, gain=1.414)
# ----------------------------------------------------------------------------
def xavier_uniform(key, shape, gain=1.414):
    fan_in, fan_out = shape[0], shape[1]
    bound = gain * (6.0 / (fan_in + fan_out)) ** 0.5
    return jax.random.uniform(key, shape, jnp.float32, -bound, bound)


def init_gat_params(key, nfeat, nhid, nclass, nheads):
    keys = jax.random.split(key, 2 * nheads + 2)
    heads = []
    for h in range(nheads):
        W = xavier_uniform(keys[2 * h], (nfeat, nhid))
        a = xavier_uniform(keys[2 * h + 1], (2 * nhid, 1))
        heads.append((W, a))
    W_out = xavier_uniform(keys[-2], (nhid * nheads, nclass))
    a_out = xavier_uniform(keys[-1], (2 * nclass, 1))
    return {"heads": heads, "W_out": W_out, "a_out": a_out}


# ----------------------------------------------------------------------------
# Pure-JAX reference (sanity check)
# ----------------------------------------------------------------------------
def _ref_layer(x, W, a, adj, alpha, concat):
    h = x @ W
    F_out = W.shape[1]
    f1 = h @ a[:F_out, :]
    f2 = h @ a[F_out:, :]
    e = f1 + f2.T
    e = jnp.where(e > 0, e, alpha * e)
    att = jnp.where(adj > 0, e, -9e15)
    att = jax.nn.softmax(att, axis=1)
    hp = att @ h
    return jax.nn.elu(hp) if concat else hp


def _ref_forward(x, adj, params, alpha):
    x = x[0]
    heads = [_ref_layer(x, W, a, adj, alpha, True) for (W, a) in params["heads"]]
    x = jnp.concatenate(heads, axis=1)
    out = _ref_layer(x, params["W_out"], params["a_out"], adj, alpha, False)
    return jax.nn.softmax(jax.nn.elu(out), axis=1)


# ----------------------------------------------------------------------------
if __name__ == "__main__":
    N = 8          # number of graph nodes
    nfeat = 32
    nhid = 16
    nclass = 8
    nheads = 4
    alpha = 0.2
    dropout = 0.5  # eval mode -> identity

    key = jax.random.PRNGKey(0)
    k_x, k_adj, k_p = jax.random.split(key, 3)

    x = jax.random.normal(k_x, (1, N, nfeat), jnp.float32)
    # Random binary adjacency with self loops (no all-masked rows).
    adj = (jax.random.uniform(k_adj, (N, N)) > 0.5).astype(jnp.float32)
    adj = jnp.maximum(adj, jnp.eye(N, dtype=jnp.float32))

    params = init_gat_params(k_p, nfeat, nhid, nclass, nheads)

    out = gat_forward(x, adj, params, alpha=alpha)
    out = jax.block_until_ready(out)

    ref = _ref_forward(x, adj, params, alpha)
    assert out.shape == (N, nclass)
    # approx EUP reciprocal in the softmaxes -> slightly looser tolerance than f32-exact
    assert jnp.allclose(out, ref, rtol=1e-2, atol=1e-3), "mismatch vs JAX reference"

    print("KERNEL_OK")
</pallas_src>

<mosaic_0001>
module attributes {stable_mosaic.version = 11 : i64} {
  func.func @_gat_fused_kernel(%arg0: memref<8x32xf32, #tpu.memory_space<vmem>>, %arg1: memref<32x64xf32, #tpu.memory_space<vmem>>, %arg2: memref<64x8xf32, #tpu.memory_space<vmem>>, %arg3: memref<64x8xf32, #tpu.memory_space<vmem>>, %arg4: memref<8x2xf32, #tpu.memory_space<vmem>>, %arg5: memref<8x8xf32, #tpu.memory_space<vmem>>, %arg6: memref<8x8xf32, #tpu.memory_space<vmem>>) attributes {dimension_semantics = [], scalar_prefetch = 0 : i64, scratch_operands = 0 : i64, tpu.core_type = #tpu.core_type<tc>} {
    %c0 = arith.constant 0 : index
    %c0_0 = arith.constant 0 : index
    %0 = vector.load %arg0[%c0, %c0_0] : memref<8x32xf32, #tpu.memory_space<vmem>>, vector<8x32xf32>
    %c0_1 = arith.constant 0 : index
    %c0_2 = arith.constant 0 : index
    %1 = vector.load %arg5[%c0_1, %c0_2] : memref<8x8xf32, #tpu.memory_space<vmem>>, vector<8x8xf32>
    %c0_3 = arith.constant 0 : index
    %c0_4 = arith.constant 0 : index
    %2 = vector.load %arg1[%c0_3, %c0_4] : memref<32x64xf32, #tpu.memory_space<vmem>>, vector<32x64xf32>
    %cst = arith.constant dense<0.000000e+00> : vector<8x64xf32>
    %3 = tpu.matmul %0, %2, %cst {dimension_numbers = #tpu.dot_dimension_numbers<[1], [0], [0], [1], [0, 0, 1, 1], [], []>} : vector<8x32xf32>, vector<32x64xf32>, vector<8x64xf32> -> vector<8x64xf32>
    %c0_5 = arith.constant 0 : index
    %c0_6 = arith.constant 0 : index
    %4 = vector.load %arg2[%c0_5, %c0_6] : memref<64x8xf32, #tpu.memory_space<vmem>>, vector<64x8xf32>
    %cst_7 = arith.constant dense<0.000000e+00> : vector<8x8xf32>
    %5 = tpu.matmul %3, %4, %cst_7 {dimension_numbers = #tpu.dot_dimension_numbers<[1], [0], [0], [1], [0, 0, 1, 1], [], []>} : vector<8x64xf32>, vector<64x8xf32>, vector<8x8xf32> -> vector<8x8xf32>
    %6 = tpu.transpose %5, [1, 0] : vector<8x8xf32> -> vector<8x8xf32>
    %c0_8 = arith.constant 0 : index
    %c0_9 = arith.constant 0 : index
    %7 = vector.load %arg3[%c0_8, %c0_9] : memref<64x8xf32, #tpu.memory_space<vmem>>, vector<64x8xf32>
    %cst_10 = arith.constant 0.000000e+00 : f32
    %8 = vector.broadcast %cst_10 : f32 to vector<8x8xf32>
    %9 = vector.extract_strided_slice %3 {offsets = [0, 0], sizes = [8, 16], strides = [1, 1]} : vector<8x64xf32> to vector<8x16xf32>
    %10 = vector.extract_strided_slice %5 {offsets = [0, 0], sizes = [8, 1], strides = [1, 1]} : vector<8x8xf32> to vector<8x1xf32>
    %11 = vector.extract_strided_slice %6 {offsets = [4, 0], sizes = [1, 8], strides = [1, 1]} : vector<8x8xf32> to vector<1x8xf32>
    %12 = vector.broadcast %10 : vector<8x1xf32> to vector<8x8xf32>
    %13 = vector.broadcast %11 : vector<1x8xf32> to vector<8x8xf32>
    %14 = arith.addf %12, %13 : vector<8x8xf32>
    %cst_11 = arith.constant 0.000000e+00 : f32
    %15 = vector.broadcast %cst_11 : f32 to vector<8x8xf32>
    %16 = arith.cmpf ogt, %14, %15 : vector<8x8xf32>
    %cst_12 = arith.constant 2.000000e-01 : f32
    %17 = vector.broadcast %cst_12 : f32 to vector<8x8xf32>
    %18 = arith.mulf %17, %14 : vector<8x8xf32>
    %19 = arith.select %16, %14, %18 : vector<8x8xi1>, vector<8x8xf32>
    %cst_13 = arith.constant 0.000000e+00 : f32
    %20 = vector.broadcast %cst_13 : f32 to vector<8x8xf32>
    %21 = arith.cmpf ogt, %1, %20 : vector<8x8xf32>
    %cst_14 = arith.constant -9.000000e+15 : f32
    %22 = vector.broadcast %cst_14 : f32 to vector<8x8xf32>
    %23 = arith.select %21, %19, %22 : vector<8x8xi1>, vector<8x8xf32>
    %cst_15 = arith.constant dense<0xFF800000> : vector<8xf32>
    %24 = vector.multi_reduction <maximumf>, %23, %cst_15 [1] : vector<8x8xf32> to vector<8xf32>
    %25 = vector.shape_cast %24 : vector<8xf32> to vector<8x1xf32>
    %26 = vector.broadcast %25 : vector<8x1xf32> to vector<8x8xf32>
    %27 = arith.subf %23, %26 : vector<8x8xf32>
    %28 = math.exp %27 : vector<8x8xf32>
    %cst_16 = arith.constant dense<0.000000e+00> : vector<8xf32>
    %29 = vector.multi_reduction <add>, %28, %cst_16 [1] : vector<8x8xf32> to vector<8xf32>
    %30 = vector.shape_cast %29 : vector<8xf32> to vector<8x1xf32>
    %31 = tpu.reciprocal %30 {approx = true} : vector<8x1xf32> -> vector<8x1xf32>
    %32 = vector.broadcast %31 : vector<8x1xf32> to vector<8x8xf32>
    %33 = arith.mulf %28, %32 : vector<8x8xf32>
    %cst_17 = arith.constant dense<0.000000e+00> : vector<8x16xf32>
    %34 = tpu.matmul %33, %9, %cst_17 {dimension_numbers = #tpu.dot_dimension_numbers<[1], [0], [0], [1], [0, 0, 1, 1], [], []>} : vector<8x8xf32>, vector<8x16xf32>, vector<8x16xf32> -> vector<8x16xf32>
    %cst_18 = arith.constant 0.000000e+00 : f32
    %35 = vector.broadcast %cst_18 : f32 to vector<8x16xf32>
    %36 = arith.cmpf ogt, %34, %35 : vector<8x16xf32>
    %37 = math.exp %34 : vector<8x16xf32>
    %cst_19 = arith.constant 1.000000e+00 : f32
    %38 = vector.broadcast %cst_19 : f32 to vector<8x16xf32>
    %39 = arith.subf %37, %38 : vector<8x16xf32>
    %40 = arith.select %36, %34, %39 : vector<8x16xi1>, vector<8x16xf32>
    %41 = vector.extract_strided_slice %7 {offsets = [0, 0], sizes = [16, 8], strides = [1, 1]} : vector<64x8xf32> to vector<16x8xf32>
    %cst_20 = arith.constant dense<0.000000e+00> : vector<8x8xf32>
    %42 = tpu.matmul %40, %41, %cst_20 {dimension_numbers = #tpu.dot_dimension_numbers<[1], [0], [0], [1], [0, 0, 1, 1], [], []>} : vector<8x16xf32>, vector<16x8xf32>, vector<8x8xf32> -> vector<8x8xf32>
    %43 = arith.addf %8, %42 : vector<8x8xf32>
    %44 = vector.extract_strided_slice %3 {offsets = [0, 16], sizes = [8, 16], strides = [1, 1]} : vector<8x64xf32> to vector<8x16xf32>
    %45 = vector.extract_strided_slice %5 {offsets = [0, 1], sizes = [8, 1], strides = [1, 1]} : vector<8x8xf32> to vector<8x1xf32>
    %46 = vector.extract_strided_slice %6 {offsets = [5, 0], sizes = [1, 8], strides = [1, 1]} : vector<8x8xf32> to vector<1x8xf32>
    %47 = vector.broadcast %45 : vector<8x1xf32> to vector<8x8xf32>
    %48 = vector.broadcast %46 : vector<1x8xf32> to vector<8x8xf32>
    %49 = arith.addf %47, %48 : vector<8x8xf32>
    %cst_21 = arith.constant 0.000000e+00 : f32
    %50 = vector.broadcast %cst_21 : f32 to vector<8x8xf32>
    %51 = arith.cmpf ogt, %49, %50 : vector<8x8xf32>
    %cst_22 = arith.constant 2.000000e-01 : f32
    %52 = vector.broadcast %cst_22 : f32 to vector<8x8xf32>
    %53 = arith.mulf %52, %49 : vector<8x8xf32>
    %54 = arith.select %51, %49, %53 : vector<8x8xi1>, vector<8x8xf32>
    %cst_23 = arith.constant 0.000000e+00 : f32
    %55 = vector.broadcast %cst_23 : f32 to vector<8x8xf32>
    %56 = arith.cmpf ogt, %1, %55 : vector<8x8xf32>
    %cst_24 = arith.constant -9.000000e+15 : f32
    %57 = vector.broadcast %cst_24 : f32 to vector<8x8xf32>
    %58 = arith.select %56, %54, %57 : vector<8x8xi1>, vector<8x8xf32>
    %cst_25 = arith.constant dense<0xFF800000> : vector<8xf32>
    %59 = vector.multi_reduction <maximumf>, %58, %cst_25 [1] : vector<8x8xf32> to vector<8xf32>
    %60 = vector.shape_cast %59 : vector<8xf32> to vector<8x1xf32>
    %61 = vector.broadcast %60 : vector<8x1xf32> to vector<8x8xf32>
    %62 = arith.subf %58, %61 : vector<8x8xf32>
    %63 = math.exp %62 : vector<8x8xf32>
    %cst_26 = arith.constant dense<0.000000e+00> : vector<8xf32>
    %64 = vector.multi_reduction <add>, %63, %cst_26 [1] : vector<8x8xf32> to vector<8xf32>
    %65 = vector.shape_cast %64 : vector<8xf32> to vector<8x1xf32>
    %66 = tpu.reciprocal %65 {approx = true} : vector<8x1xf32> -> vector<8x1xf32>
    %67 = vector.broadcast %66 : vector<8x1xf32> to vector<8x8xf32>
    %68 = arith.mulf %63, %67 : vector<8x8xf32>
    %cst_27 = arith.constant dense<0.000000e+00> : vector<8x16xf32>
    %69 = tpu.matmul %68, %44, %cst_27 {dimension_numbers = #tpu.dot_dimension_numbers<[1], [0], [0], [1], [0, 0, 1, 1], [], []>} : vector<8x8xf32>, vector<8x16xf32>, vector<8x16xf32> -> vector<8x16xf32>
    %cst_28 = arith.constant 0.000000e+00 : f32
    %70 = vector.broadcast %cst_28 : f32 to vector<8x16xf32>
    %71 = arith.cmpf ogt, %69, %70 : vector<8x16xf32>
    %72 = math.exp %69 : vector<8x16xf32>
    %cst_29 = arith.constant 1.000000e+00 : f32
    %73 = vector.broadcast %cst_29 : f32 to vector<8x16xf32>
    %74 = arith.subf %72, %73 : vector<8x16xf32>
    %75 = arith.select %71, %69, %74 : vector<8x16xi1>, vector<8x16xf32>
    %76 = vector.extract_strided_slice %7 {offsets = [16, 0], sizes = [16, 8], strides = [1, 1]} : vector<64x8xf32> to vector<16x8xf32>
    %cst_30 = arith.constant dense<0.000000e+00> : vector<8x8xf32>
    %77 = tpu.matmul %75, %76, %cst_30 {dimension_numbers = #tpu.dot_dimension_numbers<[1], [0], [0], [1], [0, 0, 1, 1], [], []>} : vector<8x16xf32>, vector<16x8xf32>, vector<8x8xf32> -> vector<8x8xf32>
    %78 = arith.addf %43, %77 : vector<8x8xf32>
    %79 = vector.extract_strided_slice %3 {offsets = [0, 32], sizes = [8, 16], strides = [1, 1]} : vector<8x64xf32> to vector<8x16xf32>
    %80 = vector.extract_strided_slice %5 {offsets = [0, 2], sizes = [8, 1], strides = [1, 1]} : vector<8x8xf32> to vector<8x1xf32>
    %81 = vector.extract_strided_slice %6 {offsets = [6, 0], sizes = [1, 8], strides = [1, 1]} : vector<8x8xf32> to vector<1x8xf32>
    %82 = vector.broadcast %80 : vector<8x1xf32> to vector<8x8xf32>
    %83 = vector.broadcast %81 : vector<1x8xf32> to vector<8x8xf32>
    %84 = arith.addf %82, %83 : vector<8x8xf32>
    %cst_31 = arith.constant 0.000000e+00 : f32
    %85 = vector.broadcast %cst_31 : f32 to vector<8x8xf32>
    %86 = arith.cmpf ogt, %84, %85 : vector<8x8xf32>
    %cst_32 = arith.constant 2.000000e-01 : f32
    %87 = vector.broadcast %cst_32 : f32 to vector<8x8xf32>
    %88 = arith.mulf %87, %84 : vector<8x8xf32>
    %89 = arith.select %86, %84, %88 : vector<8x8xi1>, vector<8x8xf32>
    %cst_33 = arith.constant 0.000000e+00 : f32
    %90 = vector.broadcast %cst_33 : f32 to vector<8x8xf32>
    %91 = arith.cmpf ogt, %1, %90 : vector<8x8xf32>
    %cst_34 = arith.constant -9.000000e+15 : f32
    %92 = vector.broadcast %cst_34 : f32 to vector<8x8xf32>
    %93 = arith.select %91, %89, %92 : vector<8x8xi1>, vector<8x8xf32>
    %cst_35 = arith.constant dense<0xFF800000> : vector<8xf32>
    %94 = vector.multi_reduction <maximumf>, %93, %cst_35 [1] : vector<8x8xf32> to vector<8xf32>
    %95 = vector.shape_cast %94 : vector<8xf32> to vector<8x1xf32>
    %96 = vector.broadcast %95 : vector<8x1xf32> to vector<8x8xf32>
    %97 = arith.subf %93, %96 : vector<8x8xf32>
    %98 = math.exp %97 : vector<8x8xf32>
    %cst_36 = arith.constant dense<0.000000e+00> : vector<8xf32>
    %99 = vector.multi_reduction <add>, %98, %cst_36 [1] : vector<8x8xf32> to vector<8xf32>
    %100 = vector.shape_cast %99 : vector<8xf32> to vector<8x1xf32>
    %101 = tpu.reciprocal %100 {approx = true} : vector<8x1xf32> -> vector<8x1xf32>
    %102 = vector.broadcast %101 : vector<8x1xf32> to vector<8x8xf32>
    %103 = arith.mulf %98, %102 : vector<8x8xf32>
    %cst_37 = arith.constant dense<0.000000e+00> : vector<8x16xf32>
    %104 = tpu.matmul %103, %79, %cst_37 {dimension_numbers = #tpu.dot_dimension_numbers<[1], [0], [0], [1], [0, 0, 1, 1], [], []>} : vector<8x8xf32>, vector<8x16xf32>, vector<8x16xf32> -> vector<8x16xf32>
    %cst_38 = arith.constant 0.000000e+00 : f32
    %105 = vector.broadcast %cst_38 : f32 to vector<8x16xf32>
    %106 = arith.cmpf ogt, %104, %105 : vector<8x16xf32>
    %107 = math.exp %104 : vector<8x16xf32>
    %cst_39 = arith.constant 1.000000e+00 : f32
    %108 = vector.broadcast %cst_39 : f32 to vector<8x16xf32>
    %109 = arith.subf %107, %108 : vector<8x16xf32>
    %110 = arith.select %106, %104, %109 : vector<8x16xi1>, vector<8x16xf32>
    %111 = vector.extract_strided_slice %7 {offsets = [32, 0], sizes = [16, 8], strides = [1, 1]} : vector<64x8xf32> to vector<16x8xf32>
    %cst_40 = arith.constant dense<0.000000e+00> : vector<8x8xf32>
    %112 = tpu.matmul %110, %111, %cst_40 {dimension_numbers = #tpu.dot_dimension_numbers<[1], [0], [0], [1], [0, 0, 1, 1], [], []>} : vector<8x16xf32>, vector<16x8xf32>, vector<8x8xf32> -> vector<8x8xf32>
    %113 = arith.addf %78, %112 : vector<8x8xf32>
    %114 = vector.extract_strided_slice %3 {offsets = [0, 48], sizes = [8, 16], strides = [1, 1]} : vector<8x64xf32> to vector<8x16xf32>
    %115 = vector.extract_strided_slice %5 {offsets = [0, 3], sizes = [8, 1], strides = [1, 1]} : vector<8x8xf32> to vector<8x1xf32>
    %116 = vector.extract_strided_slice %6 {offsets = [7, 0], sizes = [1, 8], strides = [1, 1]} : vector<8x8xf32> to vector<1x8xf32>
    %117 = vector.broadcast %115 : vector<8x1xf32> to vector<8x8xf32>
    %118 = vector.broadcast %116 : vector<1x8xf32> to vector<8x8xf32>
    %119 = arith.addf %117, %118 : vector<8x8xf32>
    %cst_41 = arith.constant 0.000000e+00 : f32
    %120 = vector.broadcast %cst_41 : f32 to vector<8x8xf32>
    %121 = arith.cmpf ogt, %119, %120 : vector<8x8xf32>
    %cst_42 = arith.constant 2.000000e-01 : f32
    %122 = vector.broadcast %cst_42 : f32 to vector<8x8xf32>
    %123 = arith.mulf %122, %119 : vector<8x8xf32>
    %124 = arith.select %121, %119, %123 : vector<8x8xi1>, vector<8x8xf32>
    %cst_43 = arith.constant 0.000000e+00 : f32
    %125 = vector.broadcast %cst_43 : f32 to vector<8x8xf32>
    %126 = arith.cmpf ogt, %1, %125 : vector<8x8xf32>
    %cst_44 = arith.constant -9.000000e+15 : f32
    %127 = vector.broadcast %cst_44 : f32 to vector<8x8xf32>
    %128 = arith.select %126, %124, %127 : vector<8x8xi1>, vector<8x8xf32>
    %cst_45 = arith.constant dense<0xFF800000> : vector<8xf32>
    %129 = vector.multi_reduction <maximumf>, %128, %cst_45 [1] : vector<8x8xf32> to vector<8xf32>
    %130 = vector.shape_cast %129 : vector<8xf32> to vector<8x1xf32>
    %131 = vector.broadcast %130 : vector<8x1xf32> to vector<8x8xf32>
    %132 = arith.subf %128, %131 : vector<8x8xf32>
    %133 = math.exp %132 : vector<8x8xf32>
    %cst_46 = arith.constant dense<0.000000e+00> : vector<8xf32>
    %134 = vector.multi_reduction <add>, %133, %cst_46 [1] : vector<8x8xf32> to vector<8xf32>
    %135 = vector.shape_cast %134 : vector<8xf32> to vector<8x1xf32>
    %136 = tpu.reciprocal %135 {approx = true} : vector<8x1xf32> -> vector<8x1xf32>
    %137 = vector.broadcast %136 : vector<8x1xf32> to vector<8x8xf32>
    %138 = arith.mulf %133, %137 : vector<8x8xf32>
    %cst_47 = arith.constant dense<0.000000e+00> : vector<8x16xf32>
    %139 = tpu.matmul %138, %114, %cst_47 {dimension_numbers = #tpu.dot_dimension_numbers<[1], [0], [0], [1], [0, 0, 1, 1], [], []>} : vector<8x8xf32>, vector<8x16xf32>, vector<8x16xf32> -> vector<8x16xf32>
    %cst_48 = arith.constant 0.000000e+00 : f32
    %140 = vector.broadcast %cst_48 : f32 to vector<8x16xf32>
    %141 = arith.cmpf ogt, %139, %140 : vector<8x16xf32>
    %142 = math.exp %139 : vector<8x16xf32>
    %cst_49 = arith.constant 1.000000e+00 : f32
    %143 = vector.broadcast %cst_49 : f32 to vector<8x16xf32>
    %144 = arith.subf %142, %143 : vector<8x16xf32>
    %145 = arith.select %141, %139, %144 : vector<8x16xi1>, vector<8x16xf32>
    %146 = vector.extract_strided_slice %7 {offsets = [48, 0], sizes = [16, 8], strides = [1, 1]} : vector<64x8xf32> to vector<16x8xf32>
    %cst_50 = arith.constant dense<0.000000e+00> : vector<8x8xf32>
    %147 = tpu.matmul %145, %146, %cst_50 {dimension_numbers = #tpu.dot_dimension_numbers<[1], [0], [0], [1], [0, 0, 1, 1], [], []>} : vector<8x16xf32>, vector<16x8xf32>, vector<8x8xf32> -> vector<8x8xf32>
    %148 = arith.addf %113, %147 : vector<8x8xf32>
    %c0_51 = arith.constant 0 : index
    %c0_52 = arith.constant 0 : index
    %149 = vector.load %arg4[%c0_51, %c0_52] : memref<8x2xf32, #tpu.memory_space<vmem>>, vector<8x2xf32>
    %cst_53 = arith.constant dense<0.000000e+00> : vector<8x2xf32>
    %150 = tpu.matmul %148, %149, %cst_53 {dimension_numbers = #tpu.dot_dimension_numbers<[1], [0], [0], [1], [0, 0, 1, 1], [], []>} : vector<8x8xf32>, vector<8x2xf32>, vector<8x2xf32> -> vector<8x2xf32>
    %151 = tpu.transpose %150, [1, 0] : vector<8x2xf32> -> vector<2x8xf32>
    %152 = vector.extract_strided_slice %150 {offsets = [0, 0], sizes = [8, 1], strides = [1, 1]} : vector<8x2xf32> to vector<8x1xf32>
    %153 = vector.extract_strided_slice %151 {offsets = [1, 0], sizes = [1, 8], strides = [1, 1]} : vector<2x8xf32> to vector<1x8xf32>
    %154 = vector.broadcast %152 : vector<8x1xf32> to vector<8x8xf32>
    %155 = vector.broadcast %153 : vector<1x8xf32> to vector<8x8xf32>
    %156 = arith.addf %154, %155 : vector<8x8xf32>
    %cst_54 = arith.constant 0.000000e+00 : f32
    %157 = vector.broadcast %cst_54 : f32 to vector<8x8xf32>
    %158 = arith.cmpf ogt, %156, %157 : vector<8x8xf32>
    %cst_55 = arith.constant 2.000000e-01 : f32
    %159 = vector.broadcast %cst_55 : f32 to vector<8x8xf32>
    %160 = arith.mulf %159, %156 : vector<8x8xf32>
    %161 = arith.select %158, %156, %160 : vector<8x8xi1>, vector<8x8xf32>
    %cst_56 = arith.constant 0.000000e+00 : f32
    %162 = vector.broadcast %cst_56 : f32 to vector<8x8xf32>
    %163 = arith.cmpf ogt, %1, %162 : vector<8x8xf32>
    %cst_57 = arith.constant -9.000000e+15 : f32
    %164 = vector.broadcast %cst_57 : f32 to vector<8x8xf32>
    %165 = arith.select %163, %161, %164 : vector<8x8xi1>, vector<8x8xf32>
    %cst_58 = arith.constant dense<0xFF800000> : vector<8xf32>
    %166 = vector.multi_reduction <maximumf>, %165, %cst_58 [1] : vector<8x8xf32> to vector<8xf32>
    %167 = vector.shape_cast %166 : vector<8xf32> to vector<8x1xf32>
    %168 = vector.broadcast %167 : vector<8x1xf32> to vector<8x8xf32>
    %169 = arith.subf %165, %168 : vector<8x8xf32>
    %170 = math.exp %169 : vector<8x8xf32>
    %cst_59 = arith.constant dense<0.000000e+00> : vector<8xf32>
    %171 = vector.multi_reduction <add>, %170, %cst_59 [1] : vector<8x8xf32> to vector<8xf32>
    %172 = vector.shape_cast %171 : vector<8xf32> to vector<8x1xf32>
    %173 = tpu.reciprocal %172 {approx = true} : vector<8x1xf32> -> vector<8x1xf32>
    %174 = vector.broadcast %173 : vector<8x1xf32> to vector<8x8xf32>
    %175 = arith.mulf %170, %174 : vector<8x8xf32>
    %cst_60 = arith.constant dense<0.000000e+00> : vector<8x8xf32>
    %176 = tpu.matmul %175, %148, %cst_60 {dimension_numbers = #tpu.dot_dimension_numbers<[1], [0], [0], [1], [0, 0, 1, 1], [], []>} : vector<8x8xf32>, vector<8x8xf32>, vector<8x8xf32> -> vector<8x8xf32>
    %cst_61 = arith.constant 0.000000e+00 : f32
    %177 = vector.broadcast %cst_61 : f32 to vector<8x8xf32>
    %178 = arith.cmpf ogt, %176, %177 : vector<8x8xf32>
    %179 = math.exp %176 : vector<8x8xf32>
    %cst_62 = arith.constant 1.000000e+00 : f32
    %180 = vector.broadcast %cst_62 : f32 to vector<8x8xf32>
    %181 = arith.subf %179, %180 : vector<8x8xf32>
    %182 = arith.select %178, %176, %181 : vector<8x8xi1>, vector<8x8xf32>
    %cst_63 = arith.constant dense<0xFF800000> : vector<8xf32>
    %183 = vector.multi_reduction <maximumf>, %182, %cst_63 [1] : vector<8x8xf32> to vector<8xf32>
    %184 = vector.shape_cast %183 : vector<8xf32> to vector<8x1xf32>
    %185 = vector.broadcast %184 : vector<8x1xf32> to vector<8x8xf32>
    %186 = arith.subf %182, %185 : vector<8x8xf32>
    %187 = math.exp %186 : vector<8x8xf32>
    %cst_64 = arith.constant dense<0.000000e+00> : vector<8xf32>
    %188 = vector.multi_reduction <add>, %187, %cst_64 [1] : vector<8x8xf32> to vector<8xf32>
    %189 = vector.shape_cast %188 : vector<8xf32> to vector<8x1xf32>
    %190 = tpu.reciprocal %189 {approx = true} : vector<8x1xf32> -> vector<8x1xf32>
    %191 = vector.broadcast %190 : vector<8x1xf32> to vector<8x8xf32>
    %192 = arith.mulf %187, %191 : vector<8x8xf32>
    %c0_65 = arith.constant 0 : index
    %c0_66 = arith.constant 0 : index
    %193 = vector.load %arg6[%c0_65, %c0_66] : memref<8x8xf32, #tpu.memory_space<vmem>>, vector<8x8xf32>
    tpu.vector_store %arg6[%c0_65, %c0_66], %192 {strides = array<i32>} : memref<8x8xf32, #tpu.memory_space<vmem>>, vector<8x8xf32>,
    return
  }
}

</mosaic_0001>

<llo_original>
// kernel: tpu_custom_call.1
$region0: #{tpu_custom_call.1}
  #allocation0 [shape = 'u32[]', space=smem, size = 0x4, offset = 0x4, fixed_abs, tag = 'smem constant byte address 0x4 - core index']
  #allocation1 [shape = 'u32[144,128]{1,0:T(1,128)}', space=vmem, size = 0x12000, scoped, tag = 'internal scratch']
  %s0 = inlined_call_operand.vmem [shape: f32[8,32], index: 0, kind: input, shape index: {}]
  %s1 = inlined_call_operand.vmem [shape: f32[32,64], index: 1, kind: input, shape index: {}]
  %s2 = inlined_call_operand.vmem [shape: f32[64,8], index: 2, kind: input, shape index: {}]
  %s3 = inlined_call_operand.vmem [shape: f32[64,8], index: 3, kind: input, shape index: {}]
  %s4 = inlined_call_operand.vmem [shape: f32[8,2], index: 4, kind: input, shape index: {}]
  %s5 = inlined_call_operand.vmem [shape: f32[8,8], index: 5, kind: input, shape index: {}]
  %s6 = inlined_call_operand.hbm [shape: f32[8,8], index: 6, kind: output, shape index: {}]
  %s7 = sld [smem:[#allocation0]]
  $region34: #{tpu_custom_call.1} parent=0
    _
  %s9 = ssub.s32 1, %s7
  %s10 = scalar_select 0, %s9, %s7
  $region1: #{tpu_custom_call.1} parent=0
    #allocation2 [shape = 'u8[4096]{0}', space=vmem, size = 0x1000, scoped, tag = 'output window, operand 0, single buffered']
    #allocation3 [shape = 's32[1]{0}', space=sflag, size = 0x4, scoped, tag = 'scoped memory for tpu_custom_call.1']
    %11 = vsyncpa [#allocation3], 0
    // Predicated region
    $region2: #{tpu_custom_call.1} parent=1 // pred_check
      _
    $region3: #{tpu_custom_call.1} parent=1 // pred_check_branch
      %13 = sbr.rel (0) target = $region5
    $region4: #{tpu_custom_call.1} parent=1 // pred_region
      _
    $region5: #{tpu_custom_call.1} parent=1 // pred_fallthru
      _
    // Predicated region
    $region6: #{tpu_custom_call.1} parent=1 // pred_check
      _
    $region7: #{tpu_custom_call.1} parent=1 // pred_check_branch
      %15 = sbr.rel (0) target = $region9
    $region8: #{tpu_custom_call.1} parent=1 // pred_region
      _
    $region9: #{tpu_custom_call.1} parent=1 // pred_fallthru
      _
    // Predicated region
    $region10: #{tpu_custom_call.1} parent=1 // pred_check
      _
    $region11: #{tpu_custom_call.1} parent=1 // pred_check_branch
      %17 = sbr.rel (0) target = $region13
    $region12: #{tpu_custom_call.1} parent=1 // pred_region
      _
    $region13: #{tpu_custom_call.1} parent=1 // pred_fallthru
      _
    // Predicated region
    $region14: #{tpu_custom_call.1} parent=1 // pred_check
      _
    $region15: #{tpu_custom_call.1} parent=1 // pred_check_branch
      %19 = sbr.rel (0) target = $region17
    $region16: #{tpu_custom_call.1} parent=1 // pred_region
      _
    $region17: #{tpu_custom_call.1} parent=1 // pred_fallthru
      _
    // Predicated region
    $region18: #{tpu_custom_call.1} parent=1 // pred_check
      _
    $region19: #{tpu_custom_call.1} parent=1 // pred_check_branch
      %21 = sbr.rel (0) target = $region21
    $region20: #{tpu_custom_call.1} parent=1 // pred_region
      _
    $region21: #{tpu_custom_call.1} parent=1 // pred_fallthru
      _
    // Predicated region
    $region22: #{tpu_custom_call.1} parent=1 // pred_check
      _
    $region23: #{tpu_custom_call.1} parent=1 // pred_check_branch
      %23 = sbr.rel (0) target = $region25
    $region24: #{tpu_custom_call.1} parent=1 // pred_region
      _
    $region25: #{tpu_custom_call.1} parent=1 // pred_fallthru
      _
    %v24 = vld [vmem:[%s0] sm:$0xff]
    %v25 = vld [vmem:[%s5] sm:$0xff]
    %v26 = vld [vmem:[%s1] sm:$0xff]
    %v27 = vld [vmem:[%s1 + $0x8] sm:$0xff]
    %v28 = vld [vmem:[%s1 + $0x10] sm:$0xff]
    %v29 = vld [vmem:[%s1 + $0x18] sm:$0xff]
    %vm30 = vcmask 261120
    %v32 = vsel %vm30, %v24, 0
    %34 = vmatprep.subr.mxu0 0.0
    %35 = vmatpush1.msra.mxu0 %v26
    %36 = vmatprep.subr.mxu0 0.0
    %37 = vmatpush1.msra.mxu0 %v27
    %38 = vmatprep.subr.mxu0 0.0
    %39 = vmatpush1.msra.mxu0 %v28
    %40 = vmatprep.subr.mxu0 0.0
    %41 = vmatpush1.msra.mxu0 %v29
    %42 = vmatprep.subr.mxu0 0.0
    %43 = vmatpush1.msra.mxu0 0.0
    %44 = vmatprep.subr.mxu0 0.0
    %45 = vmatpush1.msra.mxu0 0.0
    %46 = vmatprep.subr.mxu0 0.0
    %47 = vmatpush1.msra.mxu0 0.0
    %48 = vmatprep.subr.mxu0 0.0
    %49 = vmatpush1.msra.mxu0 0.0
    %50 = vmatprep.subr.mxu0 0.0
    %51 = vmatpush1.msra.mxu0 0.0
    %52 = vmatprep.subr.mxu0 0.0
    %53 = vmatpush1.msra.mxu0 0.0
    %54 = vmatprep.subr.mxu0 0.0
    %55 = vmatpush1.msra.mxu0 0.0
    %56 = vmatprep.subr.mxu0 0.0
    %57 = vmatpush1.msra.mxu0 0.0
    %58 = vmatprep.subr.mxu0 0.0
    %59 = vmatpush1.msra.mxu0 0.0
    %60 = vmatprep.subr.mxu0 0.0
    %61 = vmatpush1.msra.mxu0 0.0
    %62 = vmatprep.subr.mxu0 0.0
    %63 = vmatpush1.msra.mxu0 0.0
    %64 = vmatprep.subr.mxu0 0.0
    %65 = vmatpush1.msra.mxu0 0.0
    %66 = vmatprep.subr.mxu0 0.0
    %67 = vmatpush1.msra.mxu0 0.0
    %68 = vmatprep.subr.mxu0 0.0
    %69 = vmatpush1.msra.mxu0 0.0
    %70 = vmatprep.subr.mxu0 0.0
    %71 = vmatpush1.msra.mxu0 0.0
    %72 = vmatprep.subr.mxu0 0.0
    %73 = vmatpush1.msra.mxu0 0.0
    %74 = vmatprep.subr.mxu0 0.0
    %75 = vmatpush1.msra.mxu0 0.0
    %76 = vmatprep.subr.mxu0 0.0
    %77 = vmatpush1.msra.mxu0 0.0
    %78 = vmatprep.subr.mxu0 0.0
    %79 = vmatpush1.msra.mxu0 0.0
    %80 = vmatprep.subr.mxu0 0.0
    %81 = vmatpush1.msra.mxu0 0.0
    %82 = vmatprep.subr.mxu0 0.0
    %83 = vmatpush1.msra.mxu0 0.0
    %84 = vmatprep.subr.mxu0 0.0
    %85 = vmatpush1.msra.mxu0 0.0
    %86 = vmatprep.subr.mxu0 0.0
    %87 = vmatpush1.msra.mxu0 0.0
    %88 = vmatprep.subr.mxu0 0.0
    %89 = vmatpush1.msra.mxu0 0.0
    %90 = vmatprep.subr.mxu0 0.0
    %91 = vmatpush1.msra.mxu0 0.0
    %92 = vmatprep.subr.mxu0 0.0
    %93 = vmatpush1.msra.mxu0 0.0
    %94 = vmatprep.subr.mxu0 0.0
    %95 = vmatpush1.msra.mxu0 0.0
    %96 = vmatprep.subr.mxu0 0.0
    %97 = vmatpush1.msra.mxu0 0.0
    %98 = vmatprep.mubr.f32.mxu0 0.0
    %99 = vmatmul.mubr.f32.gmra.mrb[0].mxu0 %v32
    %v100 = vpop.f32.mrb[0].mxu0
    %v101 = vadd.f32 0.0, %v100
    %v102 = vpop.f32.mrb[0].mxu0
    %103 = vdwg.mxu0
    %v104 = vld [vmem:[%s2] sm:$0xff]
    %v105 = vld [vmem:[%s2 + $0x8] sm:$0xff]
    %v106 = vld [vmem:[%s2 + $0x10] sm:$0xff]
    %v107 = vld [vmem:[%s2 + $0x18] sm:$0xff]
    %v108 = vld [vmem:[%s2 + $0x20] sm:$0xff]
    %v109 = vld [vmem:[%s2 + $0x28] sm:$0xff]
    %v110 = vld [vmem:[%s2 + $0x30] sm:$0xff]
    %v111 = vld [vmem:[%s2 + $0x38] sm:$0xff]
    %vm112 = vcmask 523264
    %v114 = vsel %vm112, %v101, 0
    %116 = vmatprep.subr.mxu0 0.0
    %117 = vmatpush1.msra.mxu0 %v104
    %118 = vmatprep.subr.mxu0 0.0
    %119 = vmatpush1.msra.mxu0 %v105
    %120 = vmatprep.subr.mxu0 0.0
    %121 = vmatpush1.msra.mxu0 %v106
    %122 = vmatprep.subr.mxu0 0.0
    %123 = vmatpush1.msra.mxu0 %v107
    %124 = vmatprep.subr.mxu0 0.0
    %125 = vmatpush1.msra.mxu0 %v108
    %126 = vmatprep.subr.mxu0 0.0
    %127 = vmatpush1.msra.mxu0 %v109
    %128 = vmatprep.subr.mxu0 0.0
    %129 = vmatpush1.msra.mxu0 %v110
    %130 = vmatprep.subr.mxu0 0.0
    %131 = vmatpush1.msra.mxu0 %v111
    %132 = vmatprep.subr.mxu0 0.0
    %133 = vmatpush1.msra.mxu0 0.0
    %134 = vmatprep.subr.mxu0 0.0
    %135 = vmatpush1.msra.mxu0 0.0
    %136 = vmatprep.subr.mxu0 0.0
    %137 = vmatpush1.msra.mxu0 0.0
    %138 = vmatprep.subr.mxu0 0.0
    %139 = vmatpush1.msra.mxu0 0.0
    %140 = vmatprep.subr.mxu0 0.0
    %141 = vmatpush1.msra.mxu0 0.0
    %142 = vmatprep.subr.mxu0 0.0
    %143 = vmatpush1.msra.mxu0 0.0
    %144 = vmatprep.subr.mxu0 0.0
    %145 = vmatpush1.msra.mxu0 0.0
    %146 = vmatprep.subr.mxu0 0.0
    %147 = vmatpush1.msra.mxu0 0.0
    %148 = vmatprep.subr.mxu0 0.0
    %149 = vmatpush1.msra.mxu0 0.0
    %150 = vmatprep.subr.mxu0 0.0
    %151 = vmatpush1.msra.mxu0 0.0
    %152 = vmatprep.subr.mxu0 0.0
    %153 = vmatpush1.msra.mxu0 0.0
    %154 = vmatprep.subr.mxu0 0.0
    %155 = vmatpush1.msra.mxu0 0.0
    %156 = vmatprep.subr.mxu0 0.0
    %157 = vmatpush1.msra.mxu0 0.0
    %158 = vmatprep.subr.mxu0 0.0
    %159 = vmatpush1.msra.mxu0 0.0
    %160 = vmatprep.subr.mxu0 0.0
    %161 = vmatpush1.msra.mxu0 0.0
    %162 = vmatprep.subr.mxu0 0.0
    %163 = vmatpush1.msra.mxu0 0.0
    %164 = vmatprep.subr.mxu0 0.0
    %165 = vmatpush1.msra.mxu0 0.0
    %166 = vmatprep.subr.mxu0 0.0
    %167 = vmatpush1.msra.mxu0 0.0
    %168 = vmatprep.subr.mxu0 0.0
    %169 = vmatpush1.msra.mxu0 0.0
    %170 = vmatprep.subr.mxu0 0.0
    %171 = vmatpush1.msra.mxu0 0.0
    %172 = vmatprep.subr.mxu0 0.0
    %173 = vmatpush1.msra.mxu0 0.0
    %174 = vmatprep.subr.mxu0 0.0
    %175 = vmatpush1.msra.mxu0 0.0
    %176 = vmatprep.subr.mxu0 0.0
    %177 = vmatpush1.msra.mxu0 0.0
    %178 = vmatprep.subr.mxu0 0.0
    %179 = vmatpush1.msra.mxu0 0.0
    %180 = vmatprep.mubr.f32.mxu0 0.0
    %181 = vmatmul.mubr.f32.gmra.mrb[0].mxu0 %v114
    %v182 = vpop.f32.mrb[0].mxu0
    %v183 = vadd.f32 0.0, %v182
    %v184 = vpop.f32.mrb[0].mxu0
    %185 = vdwg.mxu0
    %186 = vxpose.xlu0.b32.start [1/16] %v183, 128
    %187 = vxpose.xlu0.b32.cont [2/16] 0.0, 128
    %188 = vxpose.xlu0.b32.cont [3/16] 0.0, 128
    %189 = vxpose.xlu0.b32.cont [4/16] 0.0, 128
    %190 = vxpose.xlu0.b32.cont [5/16] 0.0, 128
    %191 = vxpose.xlu0.b32.cont [6/16] 0.0, 128
    %192 = vxpose.xlu0.b32.cont [7/16] 0.0, 128
    %193 = vxpose.xlu0.b32.cont [8/16] 0.0, 128
    %194 = vxpose.xlu0.b32.cont [9/16] 0.0, 128
    %195 = vxpose.xlu0.b32.cont [10/16] 0.0, 128
    %196 = vxpose.xlu0.b32.cont [11/16] 0.0, 128
    %197 = vxpose.xlu0.b32.cont [12/16] 0.0, 128
    %198 = vxpose.xlu0.b32.cont [13/16] 0.0, 128
    %199 = vxpose.xlu0.b32.cont [14/16] 0.0, 128
    %200 = vxpose.xlu0.b32.cont [15/16] 0.0, 128
    %201 = vxpose.xlu0.b32.end [16/16] 0.0, 128
    %v202 = vpop.trf.xlu0
    %v203 = vpop.trf.xlu0
    %v204 = vpop.trf.xlu0
    %v205 = vpop.trf.xlu0
    %v206 = vpop.trf.xlu0
    %v207 = vpop.trf.xlu0
    %v208 = vpop.trf.xlu0
    %v209 = vpop.trf.xlu0
    %v210 = vpop.trf.xlu0
    %v211 = vpop.trf.xlu0
    %v212 = vpop.trf.xlu0
    %v213 = vpop.trf.xlu0
    %v214 = vpop.trf.xlu0
    %v215 = vpop.trf.xlu0
    %v216 = vpop.trf.xlu0
    %v217 = vpop.trf.xlu0
    %v218 = vld [vmem:[%s3] sm:$0xff]
    %v219 = vld [vmem:[%s3 + $0x8] sm:$0xff]
    %v220 = vld [vmem:[%s3 + $0x10] sm:$0xff]
    %v221 = vld [vmem:[%s3 + $0x18] sm:$0xff]
    %v222 = vld [vmem:[%s3 + $0x20] sm:$0xff]
    %v223 = vld [vmem:[%s3 + $0x28] sm:$0xff]
    %v224 = vld [vmem:[%s3 + $0x30] sm:$0xff]
    %v225 = vld [vmem:[%s3 + $0x38] sm:$0xff]
    %227 = vset.pattern.permute.xlu0 0
    %228 = vperm.xlu0 %227, %v183
    %v229 = vpop.permute.xlu0 %228
    %v231 = vlaneseq
    %v232 = vshrl.u32 %v231, 7
    %v233 = vsub.s32 4, %v232
    %v234 = vrot.slane %v202, %v233
    %v235 = vadd.f32 %v229, %v234
    %vm236 = vcmp.gt.f32.partialorder %v235, 0.0
    %v237 = vmul.f32 %v235, 0.2
    %v238 = vsel %vm236, %v235, %v237
    %vm239 = vcmp.gt.f32.partialorder %v25, 0.0
    %v240 = vsel %vm239, %v238, -9e+15
    %vm241 = vcmask 64512
    %v242 = vsel %vm241, %v240, -inf
    %243 = vmax.xlane.f32.xlu0 %v242
    %v244 = vpop.xlane.xlu0 %243
    %v245 = vsub.f32 %v240, %v244
    %v246 = vmul.f32 %v245, 1.442695
    %v247 = vpow.pop %v246
    %v248 = vsel %vm241, %v247, 0.0
    %249 = vadd.xlane.f32.xlu0 %v248
    %v250 = vpop.xlane.xlu0 %249
    %v251 = vrcp.pop %v250
    %v252 = vmul.f32 %v247, %v251
    %v254 = vsel %vm241, %v252, 0
    %256 = vmatprep.subr.mxu0 0.0
    %257 = vmatpush1.msra.mxu0 %v101
    %258 = vmatprep.subr.mxu0 0.0
    %259 = vmatpush1.msra.mxu0 0.0
    %260 = vmatprep.subr.mxu0 0.0
    %261 = vmatpush1.msra.mxu0 0.0
    %262 = vmatprep.subr.mxu0 0.0
    %263 = vmatpush1.msra.mxu0 0.0
    %264 = vmatprep.subr.mxu0 0.0
    %265 = vmatpush1.msra.mxu0 0.0
    %266 = vmatprep.subr.mxu0 0.0
    %267 = vmatpush1.msra.mxu0 0.0
    %268 = vmatprep.subr.mxu0 0.0
    %269 = vmatpush1.msra.mxu0 0.0
    %270 = vmatprep.subr.mxu0 0.0
    %271 = vmatpush1.msra.mxu0 0.0
    %272 = vmatprep.subr.mxu0 0.0
    %273 = vmatpush1.msra.mxu0 0.0
    %274 = vmatprep.subr.mxu0 0.0
    %275 = vmatpush1.msra.mxu0 0.0
    %276 = vmatprep.subr.mxu0 0.0
    %277 = vmatpush1.msra.mxu0 0.0
    %278 = vmatprep.subr.mxu0 0.0
    %279 = vmatpush1.msra.mxu0 0.0
    %280 = vmatprep.subr.mxu0 0.0
    %281 = vmatpush1.msra.mxu0 0.0
    %282 = vmatprep.subr.mxu0 0.0
    %283 = vmatpush1.msra.mxu0 0.0
    %284 = vmatprep.subr.mxu0 0.0
    %285 = vmatpush1.msra.mxu0 0.0
    %286 = vmatprep.subr.mxu0 0.0
    %287 = vmatpush1.msra.mxu0 0.0
    %288 = vmatprep.subr.mxu0 0.0
    %289 = vmatpush1.msra.mxu0 0.0
    %290 = vmatprep.subr.mxu0 0.0
    %291 = vmatpush1.msra.mxu0 0.0
    %292 = vmatprep.subr.mxu0 0.0
    %293 = vmatpush1.msra.mxu0 0.0
    %294 = vmatprep.subr.mxu0 0.0
    %295 = vmatpush1.msra.mxu0 0.0
    %296 = vmatprep.subr.mxu0 0.0
    %297 = vmatpush1.msra.mxu0 0.0
    %298 = vmatprep.subr.mxu0 0.0
    %299 = vmatpush1.msra.mxu0 0.0
    %300 = vmatprep.subr.mxu0 0.0
    %301 = vmatpush1.msra.mxu0 0.0
    %302 = vmatprep.subr.mxu0 0.0
    %303 = vmatpush1.msra.mxu0 0.0
    %304 = vmatprep.subr.mxu0 0.0
    %305 = vmatpush1.msra.mxu0 0.0
    %306 = vmatprep.subr.mxu0 0.0
    %307 = vmatpush1.msra.mxu0 0.0
    %308 = vmatprep.subr.mxu0 0.0
    %309 = vmatpush1.msra.mxu0 0.0
    %310 = vmatprep.subr.mxu0 0.0
    %311 = vmatpush1.msra.mxu0 0.0
    %312 = vmatprep.subr.mxu0 0.0
    %313 = vmatpush1.msra.mxu0 0.0
    %314 = vmatprep.subr.mxu0 0.0
    %315 = vmatpush1.msra.mxu0 0.0
    %316 = vmatprep.subr.mxu0 0.0
    %317 = vmatpush1.msra.mxu0 0.0
    %318 = vmatprep.subr.mxu0 0.0
    %319 = vmatpush1.msra.mxu0 0.0
    %320 = vmatprep.mubr.f32.mxu0 0.0
    %321 = vmatmul.mubr.f32.gmra.mrb[0].mxu0 %v254
    %v322 = vpop.f32.mrb[0].mxu0
    %v323 = vadd.f32 0.0, %v322
    %v324 = vpop.f32.mrb[0].mxu0
    %325 = vdwg.mxu0
    %vm326 = vcmp.gt.f32.partialorder %v323, 0.0
    %v327 = vmul.f32 %v323, 1.442695
    %v328 = vpow.pop %v327
    %v329 = vsub.f32 %v328, 1.0
    %v330 = vsel %vm326, %v323, %v329
    %331 = vset.pattern.permute.xlu0 1
    %332 = vperm.xlu0 %331, %v183
    %v333 = vpop.permute.xlu0 %332
    %v335 = vlaneseq
    %v336 = vshrl.u32 %v335, 7
    %v337 = vsub.s32 5, %v336
    %v338 = vrot.slane %v202, %v337
    %v339 = vadd.f32 %v333, %v338
    %vm340 = vcmp.gt.f32.partialorder %v339, 0.0
    %v341 = vmul.f32 %v339, 0.2
    %v342 = vsel %vm340, %v339, %v341
    %v343 = vsel %vm239, %v342, -9e+15
    %v344 = vsel %vm241, %v343, -inf
    %345 = vmax.xlane.f32.xlu0 %v344
    %v346 = vpop.xlane.xlu0 %345
    %v347 = vsub.f32 %v343, %v346
    %v348 = vmul.f32 %v347, 1.442695
    %v349 = vpow.pop %v348
    %v350 = vsel %vm241, %v349, 0.0
    %351 = vadd.xlane.f32.xlu0 %v350
    %v352 = vpop.xlane.xlu0 %351
    %v353 = vrcp.pop %v352
    %v354 = vmul.f32 %v349, %v353
    %355 = vrot.lane.b32.xlu0 %v101, 112
    %v356 = vpop.permute.xlu0 %355
    %v359 = vsel %vm241, %v354, 0
    %361 = vmatprep.subr.mxu0 0.0
    %362 = vmatpush1.msra.mxu0 %v356
    %363 = vmatprep.subr.mxu0 0.0
    %364 = vmatpush1.msra.mxu0 0.0
    %365 = vmatprep.subr.mxu0 0.0
    %366 = vmatpush1.msra.mxu0 0.0
    %367 = vmatprep.subr.mxu0 0.0
    %368 = vmatpush1.msra.mxu0 0.0
    %369 = vmatprep.subr.mxu0 0.0
    %370 = vmatpush1.msra.mxu0 0.0
    %371 = vmatprep.subr.mxu0 0.0
    %372 = vmatpush1.msra.mxu0 0.0
    %373 = vmatprep.subr.mxu0 0.0
    %374 = vmatpush1.msra.mxu0 0.0
    %375 = vmatprep.subr.mxu0 0.0
    %376 = vmatpush1.msra.mxu0 0.0
    %377 = vmatprep.subr.mxu0 0.0
    %378 = vmatpush1.msra.mxu0 0.0
    %379 = vmatprep.subr.mxu0 0.0
    %380 = vmatpush1.msra.mxu0 0.0
    %381 = vmatprep.subr.mxu0 0.0
    %382 = vmatpush1.msra.mxu0 0.0
    %383 = vmatprep.subr.mxu0 0.0
    %384 = vmatpush1.msra.mxu0 0.0
    %385 = vmatprep.subr.mxu0 0.0
    %386 = vmatpush1.msra.mxu0 0.0
    %387 = vmatprep.subr.mxu0 0.0
    %388 = vmatpush1.msra.mxu0 0.0
    %389 = vmatprep.subr.mxu0 0.0
    %390 = vmatpush1.msra.mxu0 0.0
    %391 = vmatprep.subr.mxu0 0.0
    %392 = vmatpush1.msra.mxu0 0.0
    %393 = vmatprep.subr.mxu0 0.0
    %394 = vmatpush1.msra.mxu0 0.0
    %395 = vmatprep.subr.mxu0 0.0
    %396 = vmatpush1.msra.mxu0 0.0
    %397 = vmatprep.subr.mxu0 0.0
    %398 = vmatpush1.msra.mxu0 0.0
    %399 = vmatprep.subr.mxu0 0.0
    %400 = vmatpush1.msra.mxu0 0.0
    %401 = vmatprep.subr.mxu0 0.0
    %402 = vmatpush1.msra.mxu0 0.0
    %403 = vmatprep.subr.mxu0 0.0
    %404 = vmatpush1.msra.mxu0 0.0
    %405 = vmatprep.subr.mxu0 0.0
    %406 = vmatpush1.msra.mxu0 0.0
    %407 = vmatprep.subr.mxu0 0.0
    %408 = vmatpush1.msra.mxu0 0.0
    %409 = vmatprep.subr.mxu0 0.0
    %410 = vmatpush1.msra.mxu0 0.0
    %411 = vmatprep.subr.mxu0 0.0
    %412 = vmatpush1.msra.mxu0 0.0
    %413 = vmatprep.subr.mxu0 0.0
    %414 = vmatpush1.msra.mxu0 0.0
    %415 = vmatprep.subr.mxu0 0.0
    %416 = vmatpush1.msra.mxu0 0.0
    %417 = vmatprep.subr.mxu0 0.0
    %418 = vmatpush1.msra.mxu0 0.0
    %419 = vmatprep.subr.mxu0 0.0
    %420 = vmatpush1.msra.mxu0 0.0
    %421 = vmatprep.subr.mxu0 0.0
    %422 = vmatpush1.msra.mxu0 0.0
    %423 = vmatprep.subr.mxu0 0.0
    %424 = vmatpush1.msra.mxu0 0.0
    %425 = vmatprep.mubr.f32.mxu0 0.0
    %426 = vmatmul.mubr.f32.gmra.mrb[0].mxu0 %v359
    %v427 = vpop.f32.mrb[0].mxu0
    %v428 = vadd.f32 0.0, %v427
    %v429 = vpop.f32.mrb[0].mxu0
    %430 = vdwg.mxu0
    %vm431 = vcmp.gt.f32.partialorder %v428, 0.0
    %v432 = vmul.f32 %v428, 1.442695
    %v433 = vpow.pop %v432
    %v434 = vsub.f32 %v433, 1.0
    %v435 = vsel %vm431, %v428, %v434
    %vm436 = vcmask 130048
    %v438 = vsel %vm436, %v435, 0
    %440 = vmatprep.subr.mxu0 0.0
    %441 = vmatpush1.msra.mxu0 %v220
    %442 = vmatprep.subr.mxu0 0.0
    %443 = vmatpush1.msra.mxu0 %v221
    %444 = vmatprep.subr.mxu0 0.0
    %445 = vmatpush1.msra.mxu0 0.0
    %446 = vmatprep.subr.mxu0 0.0
    %447 = vmatpush1.msra.mxu0 0.0
    %448 = vmatprep.subr.mxu0 0.0
    %449 = vmatpush1.msra.mxu0 0.0
    %450 = vmatprep.subr.mxu0 0.0
    %451 = vmatpush1.msra.mxu0 0.0
    %452 = vmatprep.subr.mxu0 0.0
    %453 = vmatpush1.msra.mxu0 0.0
    %454 = vmatprep.subr.mxu0 0.0
    %455 = vmatpush1.msra.mxu0 0.0
    %456 = vmatprep.subr.mxu0 0.0
    %457 = vmatpush1.msra.mxu0 0.0
    %458 = vmatprep.subr.mxu0 0.0
    %459 = vmatpush1.msra.mxu0 0.0
    %460 = vmatprep.subr.mxu0 0.0
    %461 = vmatpush1.msra.mxu0 0.0
    %462 = vmatprep.subr.mxu0 0.0
    %463 = vmatpush1.msra.mxu0 0.0
    %464 = vmatprep.subr.mxu0 0.0
    %465 = vmatpush1.msra.mxu0 0.0
    %466 = vmatprep.subr.mxu0 0.0
    %467 = vmatpush1.msra.mxu0 0.0
    %468 = vmatprep.subr.mxu0 0.0
    %469 = vmatpush1.msra.mxu0 0.0
    %470 = vmatprep.subr.mxu0 0.0
    %471 = vmatpush1.msra.mxu0 0.0
    %472 = vmatprep.subr.mxu0 0.0
    %473 = vmatpush1.msra.mxu0 0.0
    %474 = vmatprep.subr.mxu0 0.0
    %475 = vmatpush1.msra.mxu0 0.0
    %476 = vmatprep.subr.mxu0 0.0
    %477 = vmatpush1.msra.mxu0 0.0
    %478 = vmatprep.subr.mxu0 0.0
    %479 = vmatpush1.msra.mxu0 0.0
    %480 = vmatprep.subr.mxu0 0.0
    %481 = vmatpush1.msra.mxu0 0.0
    %482 = vmatprep.subr.mxu0 0.0
    %483 = vmatpush1.msra.mxu0 0.0
    %484 = vmatprep.subr.mxu0 0.0
    %485 = vmatpush1.msra.mxu0 0.0
    %486 = vmatprep.subr.mxu0 0.0
    %487 = vmatpush1.msra.mxu0 0.0
    %488 = vmatprep.subr.mxu0 0.0
    %489 = vmatpush1.msra.mxu0 0.0
    %490 = vmatprep.subr.mxu0 0.0
    %491 = vmatpush1.msra.mxu0 0.0
    %492 = vmatprep.subr.mxu0 0.0
    %493 = vmatpush1.msra.mxu0 0.0
    %494 = vmatprep.subr.mxu0 0.0
    %495 = vmatpush1.msra.mxu0 0.0
    %496 = vmatprep.subr.mxu0 0.0
    %497 = vmatpush1.msra.mxu0 0.0
    %498 = vmatprep.subr.mxu0 0.0
    %499 = vmatpush1.msra.mxu0 0.0
    %500 = vmatprep.subr.mxu0 0.0
    %501 = vmatpush1.msra.mxu0 0.0
    %502 = vmatprep.subr.mxu0 0.0
    %503 = vmatpush1.msra.mxu0 0.0
    %504 = vmatprep.mubr.f32.mxu0 0.0
    %505 = vmatmul.mubr.f32.gmra.mrb[0].mxu0 %v438
    %v506 = vpop.f32.mrb[0].mxu0
    %v507 = vadd.f32 0.0, %v506
    %v508 = vpop.f32.mrb[0].mxu0
    %509 = vdwg.mxu0
    %v511 = vsel %vm436, %v330, 0
    %513 = vmatprep.subr.mxu0 0.0
    %514 = vmatpush1.msra.mxu0 %v218
    %515 = vmatprep.subr.mxu0 0.0
    %516 = vmatpush1.msra.mxu0 %v219
    %517 = vmatprep.subr.mxu0 0.0
    %518 = vmatpush1.msra.mxu0 0.0
    %519 = vmatprep.subr.mxu0 0.0
    %520 = vmatpush1.msra.mxu0 0.0
    %521 = vmatprep.subr.mxu0 0.0
    %522 = vmatpush1.msra.mxu0 0.0
    %523 = vmatprep.subr.mxu0 0.0
    %524 = vmatpush1.msra.mxu0 0.0
    %525 = vmatprep.subr.mxu0 0.0
    %526 = vmatpush1.msra.mxu0 0.0
    %527 = vmatprep.subr.mxu0 0.0
    %528 = vmatpush1.msra.mxu0 0.0
    %529 = vmatprep.subr.mxu0 0.0
    %530 = vmatpush1.msra.mxu0 0.0
    %531 = vmatprep.subr.mxu0 0.0
    %532 = vmatpush1.msra.mxu0 0.0
    %533 = vmatprep.subr.mxu0 0.0
    %534 = vmatpush1.msra.mxu0 0.0
    %535 = vmatprep.subr.mxu0 0.0
    %536 = vmatpush1.msra.mxu0 0.0
    %537 = vmatprep.subr.mxu0 0.0
    %538 = vmatpush1.msra.mxu0 0.0
    %539 = vmatprep.subr.mxu0 0.0
    %540 = vmatpush1.msra.mxu0 0.0
    %541 = vmatprep.subr.mxu0 0.0
    %542 = vmatpush1.msra.mxu0 0.0
    %543 = vmatprep.subr.mxu0 0.0
    %544 = vmatpush1.msra.mxu0 0.0
    %545 = vmatprep.subr.mxu0 0.0
    %546 = vmatpush1.msra.mxu0 0.0
    %547 = vmatprep.subr.mxu0 0.0
    %548 = vmatpush1.msra.mxu0 0.0
    %549 = vmatprep.subr.mxu0 0.0
    %550 = vmatpush1.msra.mxu0 0.0
    %551 = vmatprep.subr.mxu0 0.0
    %552 = vmatpush1.msra.mxu0 0.0
    %553 = vmatprep.subr.mxu0 0.0
    %554 = vmatpush1.msra.mxu0 0.0
    %555 = vmatprep.subr.mxu0 0.0
    %556 = vmatpush1.msra.mxu0 0.0
    %557 = vmatprep.subr.mxu0 0.0
    %558 = vmatpush1.msra.mxu0 0.0
    %559 = vmatprep.subr.mxu0 0.0
    %560 = vmatpush1.msra.mxu0 0.0
    %561 = vmatprep.subr.mxu0 0.0
    %562 = vmatpush1.msra.mxu0 0.0
    %563 = vmatprep.subr.mxu0 0.0
    %564 = vmatpush1.msra.mxu0 0.0
    %565 = vmatprep.subr.mxu0 0.0
    %566 = vmatpush1.msra.mxu0 0.0
    %567 = vmatprep.subr.mxu0 0.0
    %568 = vmatpush1.msra.mxu0 0.0
    %569 = vmatprep.subr.mxu0 0.0
    %570 = vmatpush1.msra.mxu0 0.0
    %571 = vmatprep.subr.mxu0 0.0
    %572 = vmatpush1.msra.mxu0 0.0
    %573 = vmatprep.subr.mxu0 0.0
    %574 = vmatpush1.msra.mxu0 0.0
    %575 = vmatprep.subr.mxu0 0.0
    %576 = vmatpush1.msra.mxu0 0.0
    %577 = vmatprep.mubr.f32.mxu0 0.0
    %578 = vmatmul.mubr.f32.gmra.mrb[0].mxu0 %v511
    %v579 = vpop.f32.mrb[0].mxu0
    %v580 = vadd.f32 %v507, %v579
    %v581 = vpop.f32.mrb[0].mxu0
    %582 = vdwg.mxu0
    %583 = vset.pattern.permute.xlu0 2
    %584 = vperm.xlu0 %583, %v183
    %v585 = vpop.permute.xlu0 %584
    %v587 = vlaneseq
    %v588 = vshrl.u32 %v587, 7
    %v589 = vsub.s32 6, %v588
    %v590 = vrot.slane %v202, %v589
    %v591 = vadd.f32 %v585, %v590
    %vm592 = vcmp.gt.f32.partialorder %v591, 0.0
    %v593 = vmul.f32 %v591, 0.2
    %v594 = vsel %vm592, %v591, %v593
    %v595 = vsel %vm239, %v594, -9e+15
    %v596 = vsel %vm241, %v595, -inf
    %597 = vmax.xlane.f32.xlu0 %v596
    %v598 = vpop.xlane.xlu0 %597
    %v599 = vsub.f32 %v595, %v598
    %v600 = vmul.f32 %v599, 1.442695
    %v601 = vpow.pop %v600
    %v602 = vsel %vm241, %v601, 0.0
    %603 = vadd.xlane.f32.xlu0 %v602
    %v604 = vpop.xlane.xlu0 %603
    %v605 = vrcp.pop %v604
    %v606 = vmul.f32 %v601, %v605
    %607 = vrot.lane.b32.xlu0 %v101, 96
    %v608 = vpop.permute.xlu0 %607
    %v611 = vsel %vm241, %v606, 0
    %613 = vmatprep.subr.mxu0 0.0
    %614 = vmatpush1.msra.mxu0 %v608
    %615 = vmatprep.subr.mxu0 0.0
    %616 = vmatpush1.msra.mxu0 0.0
    %617 = vmatprep.subr.mxu0 0.0
    %618 = vmatpush1.msra.mxu0 0.0
    %619 = vmatprep.subr.mxu0 0.0
    %620 = vmatpush1.msra.mxu0 0.0
    %621 = vmatprep.subr.mxu0 0.0
    %622 = vmatpush1.msra.mxu0 0.0
    %623 = vmatprep.subr.mxu0 0.0
    %624 = vmatpush1.msra.mxu0 0.0
    %625 = vmatprep.subr.mxu0 0.0
    %626 = vmatpush1.msra.mxu0 0.0
    %627 = vmatprep.subr.mxu0 0.0
    %628 = vmatpush1.msra.mxu0 0.0
    %629 = vmatprep.subr.mxu0 0.0
    %630 = vmatpush1.msra.mxu0 0.0
    %631 = vmatprep.subr.mxu0 0.0
    %632 = vmatpush1.msra.mxu0 0.0
    %633 = vmatprep.subr.mxu0 0.0
    %634 = vmatpush1.msra.mxu0 0.0
    %635 = vmatprep.subr.mxu0 0.0
    %636 = vmatpush1.msra.mxu0 0.0
    %637 = vmatprep.subr.mxu0 0.0
    %638 = vmatpush1.msra.mxu0 0.0
    %639 = vmatprep.subr.mxu0 0.0
    %640 = vmatpush1.msra.mxu0 0.0
    %641 = vmatprep.subr.mxu0 0.0
    %642 = vmatpush1.msra.mxu0 0.0
    %643 = vmatprep.subr.mxu0 0.0
    %644 = vmatpush1.msra.mxu0 0.0
    %645 = vmatprep.subr.mxu0 0.0
    %646 = vmatpush1.msra.mxu0 0.0
    %647 = vmatprep.subr.mxu0 0.0
    %648 = vmatpush1.msra.mxu0 0.0
    %649 = vmatprep.subr.mxu0 0.0
    %650 = vmatpush1.msra.mxu0 0.0
    %651 = vmatprep.subr.mxu0 0.0
    %652 = vmatpush1.msra.mxu0 0.0
    %653 = vmatprep.subr.mxu0 0.0
    %654 = vmatpush1.msra.mxu0 0.0
    %655 = vmatprep.subr.mxu0 0.0
    %656 = vmatpush1.msra.mxu0 0.0
    %657 = vmatprep.subr.mxu0 0.0
    %658 = vmatpush1.msra.mxu0 0.0
    %659 = vmatprep.subr.mxu0 0.0
    %660 = vmatpush1.msra.mxu0 0.0
    %661 = vmatprep.subr.mxu0 0.0
    %662 = vmatpush1.msra.mxu0 0.0
    %663 = vmatprep.subr.mxu0 0.0
    %664 = vmatpush1.msra.mxu0 0.0
    %665 = vmatprep.subr.mxu0 0.0
    %666 = vmatpush1.msra.mxu0 0.0
    %667 = vmatprep.subr.mxu0 0.0
    %668 = vmatpush1.msra.mxu0 0.0
    %669 = vmatprep.subr.mxu0 0.0
    %670 = vmatpush1.msra.mxu0 0.0
    %671 = vmatprep.subr.mxu0 0.0
    %672 = vmatpush1.msra.mxu0 0.0
    %673 = vmatprep.subr.mxu0 0.0
    %674 = vmatpush1.msra.mxu0 0.0
    %675 = vmatprep.subr.mxu0 0.0
    %676 = vmatpush1.msra.mxu0 0.0
    %677 = vmatprep.mubr.f32.mxu0 0.0
    %678 = vmatmul.mubr.f32.gmra.mrb[0].mxu0 %v611
    %v679 = vpop.f32.mrb[0].mxu0
    %v680 = vadd.f32 0.0, %v679
    %v681 = vpop.f32.mrb[0].mxu0
    %682 = vdwg.mxu0
    %vm683 = vcmp.gt.f32.partialorder %v680, 0.0
    %v684 = vmul.f32 %v680, 1.442695
    %v685 = vpow.pop %v684
    %v686 = vsub.f32 %v685, 1.0
    %v687 = vsel %vm683, %v680, %v686
    %v689 = vsel %vm436, %v687, 0
    %691 = vmatprep.subr.mxu0 0.0
    %692 = vmatpush1.msra.mxu0 %v222
    %693 = vmatprep.subr.mxu0 0.0
    %694 = vmatpush1.msra.mxu0 %v223
    %695 = vmatprep.subr.mxu0 0.0
    %696 = vmatpush1.msra.mxu0 0.0
    %697 = vmatprep.subr.mxu0 0.0
    %698 = vmatpush1.msra.mxu0 0.0
    %699 = vmatprep.subr.mxu0 0.0
    %700 = vmatpush1.msra.mxu0 0.0
    %701 = vmatprep.subr.mxu0 0.0
    %702 = vmatpush1.msra.mxu0 0.0
    %703 = vmatprep.subr.mxu0 0.0
    %704 = vmatpush1.msra.mxu0 0.0
    %705 = vmatprep.subr.mxu0 0.0
    %706 = vmatpush1.msra.mxu0 0.0
    %707 = vmatprep.subr.mxu0 0.0
    %708 = vmatpush1.msra.mxu0 0.0
    %709 = vmatprep.subr.mxu0 0.0
    %710 = vmatpush1.msra.mxu0 0.0
    %711 = vmatprep.subr.mxu0 0.0
    %712 = vmatpush1.msra.mxu0 0.0
    %713 = vmatprep.subr.mxu0 0.0
    %714 = vmatpush1.msra.mxu0 0.0
    %715 = vmatprep.subr.mxu0 0.0
    %716 = vmatpush1.msra.mxu0 0.0
    %717 = vmatprep.subr.mxu0 0.0
    %718 = vmatpush1.msra.mxu0 0.0
    %719 = vmatprep.subr.mxu0 0.0
    %720 = vmatpush1.msra.mxu0 0.0
    %721 = vmatprep.subr.mxu0 0.0
    %722 = vmatpush1.msra.mxu0 0.0
    %723 = vmatprep.subr.mxu0 0.0
    %724 = vmatpush1.msra.mxu0 0.0
    %725 = vmatprep.subr.mxu0 0.0
    %726 = vmatpush1.msra.mxu0 0.0
    %727 = vmatprep.subr.mxu0 0.0
    %728 = vmatpush1.msra.mxu0 0.0
    %729 = vmatprep.subr.mxu0 0.0
    %730 = vmatpush1.msra.mxu0 0.0
    %731 = vmatprep.subr.mxu0 0.0
    %732 = vmatpush1.msra.mxu0 0.0
    %733 = vmatprep.subr.mxu0 0.0
    %734 = vmatpush1.msra.mxu0 0.0
    %735 = vmatprep.subr.mxu0 0.0
    %736 = vmatpush1.msra.mxu0 0.0
    %737 = vmatprep.subr.mxu0 0.0
    %738 = vmatpush1.msra.mxu0 0.0
    %739 = vmatprep.subr.mxu0 0.0
    %740 = vmatpush1.msra.mxu0 0.0
    %741 = vmatprep.subr.mxu0 0.0
    %742 = vmatpush1.msra.mxu0 0.0
    %743 = vmatprep.subr.mxu0 0.0
    %744 = vmatpush1.msra.mxu0 0.0
    %745 = vmatprep.subr.mxu0 0.0
    %746 = vmatpush1.msra.mxu0 0.0
    %747 = vmatprep.subr.mxu0 0.0
    %748 = vmatpush1.msra.mxu0 0.0
    %749 = vmatprep.subr.mxu0 0.0
    %750 = vmatpush1.msra.mxu0 0.0
    %751 = vmatprep.subr.mxu0 0.0
    %752 = vmatpush1.msra.mxu0 0.0
    %753 = vmatprep.subr.mxu0 0.0
    %754 = vmatpush1.msra.mxu0 0.0
    %755 = vmatprep.mubr.f32.mxu0 0.0
    %756 = vmatmul.mubr.f32.gmra.mrb[0].mxu0 %v689
    %v757 = vpop.f32.mrb[0].mxu0
    %v758 = vadd.f32 0.0, %v757
    %v759 = vpop.f32.mrb[0].mxu0
    %760 = vdwg.mxu0
    %v761 = vadd.f32 %v580, %v758
    %762 = vset.pattern.permute.xlu0 3
    %763 = vperm.xlu0 %762, %v183
    %v764 = vpop.permute.xlu0 %763
    %v766 = vlaneseq
    %v767 = vshrl.u32 %v766, 7
    %v768 = vsub.s32 7, %v767
    %v769 = vrot.slane %v202, %v768
    %v770 = vadd.f32 %v764, %v769
    %vm771 = vcmp.gt.f32.partialorder %v770, 0.0
    %v772 = vmul.f32 %v770, 0.2
    %v773 = vsel %vm771, %v770, %v772
    %v774 = vsel %vm239, %v773, -9e+15
    %v775 = vsel %vm241, %v774, -inf
    %776 = vmax.xlane.f32.xlu0 %v775
    %v777 = vpop.xlane.xlu0 %776
    %v778 = vsub.f32 %v774, %v777
    %v779 = vmul.f32 %v778, 1.442695
    %v780 = vpow.pop %v779
    %v781 = vsel %vm241, %v780, 0.0
    %782 = vadd.xlane.f32.xlu0 %v781
    %v783 = vpop.xlane.xlu0 %782
    %v784 = vrcp.pop %v783
    %v785 = vmul.f32 %v780, %v784
    %786 = vrot.lane.b32.xlu0 %v101, 80
    %v787 = vpop.permute.xlu0 %786
    %v790 = vsel %vm241, %v785, 0
    %792 = vmatprep.subr.mxu0 0.0
    %793 = vmatpush1.msra.mxu0 %v787
    %794 = vmatprep.subr.mxu0 0.0
    %795 = vmatpush1.msra.mxu0 0.0
    %796 = vmatprep.subr.mxu0 0.0
    %797 = vmatpush1.msra.mxu0 0.0
    %798 = vmatprep.subr.mxu0 0.0
    %799 = vmatpush1.msra.mxu0 0.0
    %800 = vmatprep.subr.mxu0 0.0
    %801 = vmatpush1.msra.mxu0 0.0
    %802 = vmatprep.subr.mxu0 0.0
    %803 = vmatpush1.msra.mxu0 0.0
    %804 = vmatprep.subr.mxu0 0.0
    %805 = vmatpush1.msra.mxu0 0.0
    %806 = vmatprep.subr.mxu0 0.0
    %807 = vmatpush1.msra.mxu0 0.0
    %808 = vmatprep.subr.mxu0 0.0
    %809 = vmatpush1.msra.mxu0 0.0
    %810 = vmatprep.subr.mxu0 0.0
    %811 = vmatpush1.msra.mxu0 0.0
    %812 = vmatprep.subr.mxu0 0.0
    %813 = vmatpush1.msra.mxu0 0.0
    %814 = vmatprep.subr.mxu0 0.0
    %815 = vmatpush1.msra.mxu0 0.0
    %816 = vmatprep.subr.mxu0 0.0
    %817 = vmatpush1.msra.mxu0 0.0
    %818 = vmatprep.subr.mxu0 0.0
    %819 = vmatpush1.msra.mxu0 0.0
    %820 = vmatprep.subr.mxu0 0.0
    %821 = vmatpush1.msra.mxu0 0.0
    %822 = vmatprep.subr.mxu0 0.0
    %823 = vmatpush1.msra.mxu0 0.0
    %824 = vmatprep.subr.mxu0 0.0
    %825 = vmatpush1.msra.mxu0 0.0
    %826 = vmatprep.subr.mxu0 0.0
    %827 = vmatpush1.msra.mxu0 0.0
    %828 = vmatprep.subr.mxu0 0.0
    %829 = vmatpush1.msra.mxu0 0.0
    %830 = vmatprep.subr.mxu0 0.0
    %831 = vmatpush1.msra.mxu0 0.0
    %832 = vmatprep.subr.mxu0 0.0
    %833 = vmatpush1.msra.mxu0 0.0
    %834 = vmatprep.subr.mxu0 0.0
    %835 = vmatpush1.msra.mxu0 0.0
    %836 = vmatprep.subr.mxu0 0.0
    %837 = vmatpush1.msra.mxu0 0.0
    %838 = vmatprep.subr.mxu0 0.0
    %839 = vmatpush1.msra.mxu0 0.0
    %840 = vmatprep.subr.mxu0 0.0
    %841 = vmatpush1.msra.mxu0 0.0
    %842 = vmatprep.subr.mxu0 0.0
    %843 = vmatpush1.msra.mxu0 0.0
    %844 = vmatprep.subr.mxu0 0.0
    %845 = vmatpush1.msra.mxu0 0.0
    %846 = vmatprep.subr.mxu0 0.0
    %847 = vmatpush1.msra.mxu0 0.0
    %848 = vmatprep.subr.mxu0 0.0
    %849 = vmatpush1.msra.mxu0 0.0
    %850 = vmatprep.subr.mxu0 0.0
    %851 = vmatpush1.msra.mxu0 0.0
    %852 = vmatprep.subr.mxu0 0.0
    %853 = vmatpush1.msra.mxu0 0.0
    %854 = vmatprep.subr.mxu0 0.0
    %855 = vmatpush1.msra.mxu0 0.0
    %856 = vmatprep.mubr.f32.mxu0 0.0
    %857 = vmatmul.mubr.f32.gmra.mrb[0].mxu0 %v790
    %v858 = vpop.f32.mrb[0].mxu0
    %v859 = vadd.f32 0.0, %v858
    %v860 = vpop.f32.mrb[0].mxu0
    %861 = vdwg.mxu0
    %vm862 = vcmp.gt.f32.partialorder %v859, 0.0
    %v863 = vmul.f32 %v859, 1.442695
    %v864 = vpow.pop %v863
    %v865 = vsub.f32 %v864, 1.0
    %v866 = vsel %vm862, %v859, %v865
    %v868 = vsel %vm436, %v866, 0
    %870 = vmatprep.subr.mxu0 0.0
    %871 = vmatpush1.msra.mxu0 %v224
    %872 = vmatprep.subr.mxu0 0.0
    %873 = vmatpush1.msra.mxu0 %v225
    %874 = vmatprep.subr.mxu0 0.0
    %875 = vmatpush1.msra.mxu0 0.0
    %876 = vmatprep.subr.mxu0 0.0
    %877 = vmatpush1.msra.mxu0 0.0
    %878 = vmatprep.subr.mxu0 0.0
    %879 = vmatpush1.msra.mxu0 0.0
    %880 = vmatprep.subr.mxu0 0.0
    %881 = vmatpush1.msra.mxu0 0.0
    %882 = vmatprep.subr.mxu0 0.0
    %883 = vmatpush1.msra.mxu0 0.0
    %884 = vmatprep.subr.mxu0 0.0
    %885 = vmatpush1.msra.mxu0 0.0
    %886 = vmatprep.subr.mxu0 0.0
    %887 = vmatpush1.msra.mxu0 0.0
    %888 = vmatprep.subr.mxu0 0.0
    %889 = vmatpush1.msra.mxu0 0.0
    %890 = vmatprep.subr.mxu0 0.0
    %891 = vmatpush1.msra.mxu0 0.0
    %892 = vmatprep.subr.mxu0 0.0
    %893 = vmatpush1.msra.mxu0 0.0
    %894 = vmatprep.subr.mxu0 0.0
    %895 = vmatpush1.msra.mxu0 0.0
    %896 = vmatprep.subr.mxu0 0.0
    %897 = vmatpush1.msra.mxu0 0.0
    %898 = vmatprep.subr.mxu0 0.0
    %899 = vmatpush1.msra.mxu0 0.0
    %900 = vmatprep.subr.mxu0 0.0
    %901 = vmatpush1.msra.mxu0 0.0
    %902 = vmatprep.subr.mxu0 0.0
    %903 = vmatpush1.msra.mxu0 0.0
    %904 = vmatprep.subr.mxu0 0.0
    %905 = vmatpush1.msra.mxu0 0.0
    %906 = vmatprep.subr.mxu0 0.0
    %907 = vmatpush1.msra.mxu0 0.0
    %908 = vmatprep.subr.mxu0 0.0
    %909 = vmatpush1.msra.mxu0 0.0
    %910 = vmatprep.subr.mxu0 0.0
    %911 = vmatpush1.msra.mxu0 0.0
    %912 = vmatprep.subr.mxu0 0.0
    %913 = vmatpush1.msra.mxu0 0.0
    %914 = vmatprep.subr.mxu0 0.0
    %915 = vmatpush1.msra.mxu0 0.0
    %916 = vmatprep.subr.mxu0 0.0
    %917 = vmatpush1.msra.mxu0 0.0
    %918 = vmatprep.subr.mxu0 0.0
    %919 = vmatpush1.msra.mxu0 0.0
    %920 = vmatprep.subr.mxu0 0.0
    %921 = vmatpush1.msra.mxu0 0.0
    %922 = vmatprep.subr.mxu0 0.0
    %923 = vmatpush1.msra.mxu0 0.0
    %924 = vmatprep.subr.mxu0 0.0
    %925 = vmatpush1.msra.mxu0 0.0
    %926 = vmatprep.subr.mxu0 0.0
    %927 = vmatpush1.msra.mxu0 0.0
    %928 = vmatprep.subr.mxu0 0.0
    %929 = vmatpush1.msra.mxu0 0.0
    %930 = vmatprep.subr.mxu0 0.0
    %931 = vmatpush1.msra.mxu0 0.0
    %932 = vmatprep.subr.mxu0 0.0
    %933 = vmatpush1.msra.mxu0 0.0
    %934 = vmatprep.mubr.f32.mxu0 0.0
    %935 = vmatmul.mubr.f32.gmra.mrb[0].mxu0 %v868
    %v936 = vpop.f32.mrb[0].mxu0
    %v937 = vadd.f32 0.0, %v936
    %v938 = vpop.f32.mrb[0].mxu0
    %939 = vdwg.mxu0
    %v940 = vadd.f32 %v761, %v937
    %v941 = vld [vmem:[%s4] sm:$0xff]
    %v943 = vsel %vm241, %v940, 0
    %945 = vmatprep.subr.mxu0 0.0
    %946 = vmatpush1.msra.mxu0 %v941
    %947 = vmatprep.subr.mxu0 0.0
    %948 = vmatpush1.msra.mxu0 0.0
    %949 = vmatprep.subr.mxu0 0.0
    %950 = vmatpush1.msra.mxu0 0.0
    %951 = vmatprep.subr.mxu0 0.0
    %952 = vmatpush1.msra.mxu0 0.0
    %953 = vmatprep.subr.mxu0 0.0
    %954 = vmatpush1.msra.mxu0 0.0
    %955 = vmatprep.subr.mxu0 0.0
    %956 = vmatpush1.msra.mxu0 0.0
    %957 = vmatprep.subr.mxu0 0.0
    %958 = vmatpush1.msra.mxu0 0.0
    %959 = vmatprep.subr.mxu0 0.0
    %960 = vmatpush1.msra.mxu0 0.0
    %961 = vmatprep.subr.mxu0 0.0
    %962 = vmatpush1.msra.mxu0 0.0
    %963 = vmatprep.subr.mxu0 0.0
    %964 = vmatpush1.msra.mxu0 0.0
    %965 = vmatprep.subr.mxu0 0.0
    %966 = vmatpush1.msra.mxu0 0.0
    %967 = vmatprep.subr.mxu0 0.0
    %968 = vmatpush1.msra.mxu0 0.0
    %969 = vmatprep.subr.mxu0 0.0
    %970 = vmatpush1.msra.mxu0 0.0
    %971 = vmatprep.subr.mxu0 0.0
    %972 = vmatpush1.msra.mxu0 0.0
    %973 = vmatprep.subr.mxu0 0.0
    %974 = vmatpush1.msra.mxu0 0.0
    %975 = vmatprep.subr.mxu0 0.0
    %976 = vmatpush1.msra.mxu0 0.0
    %977 = vmatprep.subr.mxu0 0.0
    %978 = vmatpush1.msra.mxu0 0.0
    %979 = vmatprep.subr.mxu0 0.0
    %980 = vmatpush1.msra.mxu0 0.0
    %981 = vmatprep.subr.mxu0 0.0
    %982 = vmatpush1.msra.mxu0 0.0
    %983 = vmatprep.subr.mxu0 0.0
    %984 = vmatpush1.msra.mxu0 0.0
    %985 = vmatprep.subr.mxu0 0.0
    %986 = vmatpush1.msra.mxu0 0.0
    %987 = vmatprep.subr.mxu0 0.0
    %988 = vmatpush1.msra.mxu0 0.0
    %989 = vmatprep.subr.mxu0 0.0
    %990 = vmatpush1.msra.mxu0 0.0
    %991 = vmatprep.subr.mxu0 0.0
    %992 = vmatpush1.msra.mxu0 0.0
    %993 = vmatprep.subr.mxu0 0.0
    %994 = vmatpush1.msra.mxu0 0.0
    %995 = vmatprep.subr.mxu0 0.0
    %996 = vmatpush1.msra.mxu0 0.0
    %997 = vmatprep.subr.mxu0 0.0
    %998 = vmatpush1.msra.mxu0 0.0
    %999 = vmatprep.subr.mxu0 0.0
    %1000 = vmatpush1.msra.mxu0 0.0
    %1001 = vmatprep.subr.mxu0 0.0
    %1002 = vmatpush1.msra.mxu0 0.0
    %1003 = vmatprep.subr.mxu0 0.0
    %1004 = vmatpush1.msra.mxu0 0.0
    %1005 = vmatprep.subr.mxu0 0.0
    %1006 = vmatpush1.msra.mxu0 0.0
    %1007 = vmatprep.subr.mxu0 0.0
    %1008 = vmatpush1.msra.mxu0 0.0
    %1009 = vmatprep.mubr.f32.mxu0 0.0
    %1010 = vmatmul.mubr.f32.gmra.mrb[0].mxu0 %v943
    %v1011 = vpop.f32.mrb[0].mxu0
    %v1012 = vadd.f32 0.0, %v1011
    %v1013 = vpop.f32.mrb[0].mxu0
    %1014 = vdwg.mxu0
    %1015 = vxpose.xlu0.b32.start [1/16] %v1012, 128
    %1016 = vxpose.xlu0.b32.cont [2/16] 0.0, 128
    %1017 = vxpose.xlu0.b32.cont [3/16] 0.0, 128
    %1018 = vxpose.xlu0.b32.cont [4/16] 0.0, 128
    %1019 = vxpose.xlu0.b32.cont [5/16] 0.0, 128
    %1020 = vxpose.xlu0.b32.cont [6/16] 0.0, 128
    %1021 = vxpose.xlu0.b32.cont [7/16] 0.0, 128
    %1022 = vxpose.xlu0.b32.cont [8/16] 0.0, 128
    %1023 = vxpose.xlu0.b32.cont [9/16] 0.0, 128
    %1024 = vxpose.xlu0.b32.cont [10/16] 0.0, 128
    %1025 = vxpose.xlu0.b32.cont [11/16] 0.0, 128
    %1026 = vxpose.xlu0.b32.cont [12/16] 0.0, 128
    %1027 = vxpose.xlu0.b32.cont [13/16] 0.0, 128
    %1028 = vxpose.xlu0.b32.cont [14/16] 0.0, 128
    %1029 = vxpose.xlu0.b32.cont [15/16] 0.0, 128
    %1030 = vxpose.xlu0.b32.end [16/16] 0.0, 128
    %v1031 = vpop.trf.xlu0
    %v1032 = vpop.trf.xlu0
    %v1033 = vpop.trf.xlu0
    %v1034 = vpop.trf.xlu0
    %v1035 = vpop.trf.xlu0
    %v1036 = vpop.trf.xlu0
    %v1037 = vpop.trf.xlu0
    %v1038 = vpop.trf.xlu0
    %v1039 = vpop.trf.xlu0
    %v1040 = vpop.trf.xlu0
    %v1041 = vpop.trf.xlu0
    %v1042 = vpop.trf.xlu0
    %v1043 = vpop.trf.xlu0
    %v1044 = vpop.trf.xlu0
    %v1045 = vpop.trf.xlu0
    %v1046 = vpop.trf.xlu0
    %1048 = vset.pattern.permute.xlu0 0
    %1049 = vperm.xlu0 %1048, %v1012
    %v1050 = vpop.permute.xlu0 %1049
    %v1052 = vlaneseq
    %v1053 = vshrl.u32 %v1052, 7
    %v1054 = vsub.s32 1, %v1053
    %v1055 = vrot.slane %v1031, %v1054
    %v1056 = vadd.f32 %v1050, %v1055
    %vm1057 = vcmp.gt.f32.partialorder %v1056, 0.0
    %v1058 = vmul.f32 %v1056, 0.2
    %v1059 = vsel %vm1057, %v1056, %v1058
    %v1060 = vsel %vm239, %v1059, -9e+15
    %v1061 = vsel %vm241, %v1060, -inf
    %1062 = vmax.xlane.f32.xlu0 %v1061
    %v1063 = vpop.xlane.xlu0 %1062
    %v1064 = vsub.f32 %v1060, %v1063
    %v1065 = vmul.f32 %v1064, 1.442695
    %v1066 = vpow.pop %v1065
    %v1067 = vsel %vm241, %v1066, 0.0
    %1068 = vadd.xlane.f32.xlu0 %v1067
    %v1069 = vpop.xlane.xlu0 %1068
    %v1070 = vrcp.pop %v1069
    %v1071 = vmul.f32 %v1066, %v1070
    %v1073 = vsel %vm241, %v1071, 0
    %1075 = vmatprep.subr.mxu0 0.0
    %1076 = vmatpush1.msra.mxu0 %v940
    %1077 = vmatprep.subr.mxu0 0.0
    %1078 = vmatpush1.msra.mxu0 0.0
    %1079 = vmatprep.subr.mxu0 0.0
    %1080 = vmatpush1.msra.mxu0 0.0
    %1081 = vmatprep.subr.mxu0 0.0
    %1082 = vmatpush1.msra.mxu0 0.0
    %1083 = vmatprep.subr.mxu0 0.0
    %1084 = vmatpush1.msra.mxu0 0.0
    %1085 = vmatprep.subr.mxu0 0.0
    %1086 = vmatpush1.msra.mxu0 0.0
    %1087 = vmatprep.subr.mxu0 0.0
    %1088 = vmatpush1.msra.mxu0 0.0
    %1089 = vmatprep.subr.mxu0 0.0
    %1090 = vmatpush1.msra.mxu0 0.0
    %1091 = vmatprep.subr.mxu0 0.0
    %1092 = vmatpush1.msra.mxu0 0.0
    %1093 = vmatprep.subr.mxu0 0.0
    %1094 = vmatpush1.msra.mxu0 0.0
    %1095 = vmatprep.subr.mxu0 0.0
    %1096 = vmatpush1.msra.mxu0 0.0
    %1097 = vmatprep.subr.mxu0 0.0
    %1098 = vmatpush1.msra.mxu0 0.0
    %1099 = vmatprep.subr.mxu0 0.0
    %1100 = vmatpush1.msra.mxu0 0.0
    %1101 = vmatprep.subr.mxu0 0.0
    %1102 = vmatpush1.msra.mxu0 0.0
    %1103 = vmatprep.subr.mxu0 0.0
    %1104 = vmatpush1.msra.mxu0 0.0
    %1105 = vmatprep.subr.mxu0 0.0
    %1106 = vmatpush1.msra.mxu0 0.0
    %1107 = vmatprep.subr.mxu0 0.0
    %1108 = vmatpush1.msra.mxu0 0.0
    %1109 = vmatprep.subr.mxu0 0.0
    %1110 = vmatpush1.msra.mxu0 0.0
    %1111 = vmatprep.subr.mxu0 0.0
    %1112 = vmatpush1.msra.mxu0 0.0
    %1113 = vmatprep.subr.mxu0 0.0
    %1114 = vmatpush1.msra.mxu0 0.0
    %1115 = vmatprep.subr.mxu0 0.0
    %1116 = vmatpush1.msra.mxu0 0.0
    %1117 = vmatprep.subr.mxu0 0.0
    %1118 = vmatpush1.msra.mxu0 0.0
    %1119 = vmatprep.subr.mxu0 0.0
    %1120 = vmatpush1.msra.mxu0 0.0
    %1121 = vmatprep.subr.mxu0 0.0
    %1122 = vmatpush1.msra.mxu0 0.0
    %1123 = vmatprep.subr.mxu0 0.0
    %1124 = vmatpush1.msra.mxu0 0.0
    %1125 = vmatprep.subr.mxu0 0.0
    %1126 = vmatpush1.msra.mxu0 0.0
    %1127 = vmatprep.subr.mxu0 0.0
    %1128 = vmatpush1.msra.mxu0 0.0
    %1129 = vmatprep.subr.mxu0 0.0
    %1130 = vmatpush1.msra.mxu0 0.0
    %1131 = vmatprep.subr.mxu0 0.0
    %1132 = vmatpush1.msra.mxu0 0.0
    %1133 = vmatprep.subr.mxu0 0.0
    %1134 = vmatpush1.msra.mxu0 0.0
    %1135 = vmatprep.subr.mxu0 0.0
    %1136 = vmatpush1.msra.mxu0 0.0
    %1137 = vmatprep.subr.mxu0 0.0
    %1138 = vmatpush1.msra.mxu0 0.0
    %1139 = vmatprep.mubr.f32.mxu0 0.0
    %1140 = vmatmul.mubr.f32.gmra.mrb[0].mxu0 %v1073
    %v1141 = vpop.f32.mrb[0].mxu0
    %v1142 = vadd.f32 0.0, %v1141
    %v1143 = vpop.f32.mrb[0].mxu0
    %1144 = vdwg.mxu0
    %vm1145 = vcmp.gt.f32.partialorder %v1142, 0.0
    %v1146 = vmul.f32 %v1142, 1.442695
    %v1147 = vpow.pop %v1146
    %v1148 = vsub.f32 %v1147, 1.0
    %v1149 = vsel %vm1145, %v1142, %v1148
    %v1150 = vsel %vm241, %v1149, -inf
    %1151 = vmax.xlane.f32.xlu0 %v1150
    %v1152 = vpop.xlane.xlu0 %1151
    %v1153 = vsub.f32 %v1149, %v1152
    %v1154 = vmul.f32 %v1153, 1.442695
    %v1155 = vpow.pop %v1154
    %v1156 = vsel %vm241, %v1155, 0.0
    %1157 = vadd.xlane.f32.xlu0 %v1156
    %v1158 = vpop.xlane.xlu0 %1157
    %v1159 = vrcp.pop %v1158
    %v1160 = vmul.f32 %v1155, %v1159
    %1161 = vst.msk [vmem:[#allocation2] sm:$0xff] %vm241, %v1160
    // Predicated region
    $region26: #{tpu_custom_call.1} parent=1 // pred_check
      _
    $region27: #{tpu_custom_call.1} parent=1 // pred_check_branch
      %1163 = sbr.rel (0) target = $region29
    $region28: #{tpu_custom_call.1} parent=1 // pred_region
      %s1165 = ssub.s32 128, 128
      %1166 = vsyncadd [#allocation3], %s1165
      %s1168 = sshll.u32 [#allocation2], 4
      %s1169 = int_to_ptr.vmem [resolvable:$true] %s1168
      %1171 = dma.vmem_to_hbm [thread:$0]  %s1169, 128, %s6, [#allocation3]
    $region29: #{tpu_custom_call.1} parent=1 // pred_fallthru
      _
    // Predicated region
    $region30: #{tpu_custom_call.1} parent=1 // pred_check
      _
    $region31: #{tpu_custom_call.1} parent=1 // pred_check_branch
      %1173 = sbr.rel (0) target = $region33
    $region32: #{tpu_custom_call.1} parent=1 // pred_region
      %1174 = dma.done [#allocation3], 128
    $region33: #{tpu_custom_call.1} parent=1 // pred_fallthru
      _
    %1175 = vsyncpa [#allocation3], 1

</llo_original>
